<compile_context>
chip_gen: v5e
topology: v5e:2x2
jax: 0.10.0
libtpu: 0.0.40
codegen_flags: <defaults>
</compile_context>

<pallas_src>
import math
from functools import partial

import jax
import jax.numpy as jnp
from jax.experimental import pallas as pl
from jax.experimental.pallas import tpu as pltpu


def _pick_tile(P):
    # Prefer >=4 lane-dense grid steps at Tp=512 (2 TCs x >=2 pipelined steps on v7x);
    # otherwise the largest lane-dense tile that divides P (single-TC / small P);
    # otherwise the full extent (legal, but stores become masked partial stores).
    for t in (512,):
        if P % t == 0 and P // t >= 4:
            return t
    for t in (1024, 512, 256, 128):
        if P % t == 0:
            return t
    return P


# ----------------------------------------------------------------------------------
# Fused kernel.  Every ref is channel-major with output pixels on the lane axis.
# ----------------------------------------------------------------------------------
def _meta_upsample_kernel(inp_ref, kx_ref, ky_ref, w1_ref, b1_ref, w2_ref, b2_ref,
                          who_ref, bho_ref, x_ref, wc_ref, weT_ref, out_ref, cs_ref,
                          *, num_experts, bs, c, c8):
    E = num_experts
    tp = out_ref.shape[-1]

    meta = inp_ref[...]          # (5, Tp): [1/scale, coor_h, coor_w, base_x, base_y]
    feat = meta[0:3, :]          # MLP input channels            (3, Tp)
    base_x = meta[3:4, :]        # un-normalized source x coord  (1, Tp)
    base_y = meta[4:5, :]        # un-normalized source y coord  (1, Tp)

    # --- body: two 1x1 convs.  First layer K=3 -> VPU broadcast-MACs; second -> MXU.
    h1 = b1_ref[...]                                           # (hidden, 1)
    for j in range(3):
        h1 = h1 + w1_ref[:, j:j + 1] * feat[j:j + 1, :]
    h1 = jnp.maximum(h1, 0.0)                                  # (hidden, Tp)
    h2 = jnp.maximum(
        jnp.dot(w2_ref[...], h1, preferred_element_type=jnp.float32) + b2_ref[...],
        0.0)                                                   # (hidden, Tp)

    # --- routing + offset heads fused into one (8, hidden) @ (hidden, Tp) matmul
    heads = jnp.dot(who_ref[...], h2,
                    preferred_element_type=jnp.float32) + bho_ref[...]   # (8, Tp)
    # sigmoid: exp and reciprocal both on the EUP slot (approx recip is plenty here)
    routing = pl.reciprocal(1.0 + jnp.exp(-heads[0:E, :]), approx=True)  # (E, Tp)
    off_x = heads[E:E + 1, :]                                  # (1, Tp)
    off_y = heads[E + 1:E + 2, :]                              # (1, Tp)

    # --- bilinear grid_sample (align_corners=True, zeros padding) as ONE bf16 matmul.
    sx = base_x + off_x                                        # source coords in px
    sy = base_y + off_y
    kx = kx_ref[...]                                           # (h*w, 1) precomputed
    ky = ky_ref[...]                                           # (h*w, 1) precomputed
    wbil = (jnp.maximum(1.0 - jnp.abs(kx - sx), 0.0) *
            jnp.maximum(1.0 - jnp.abs(ky - sy), 0.0)).astype(jnp.bfloat16)  # (h*w, Tp)
    fea = jnp.dot(x_ref[...], wbil,
                  preferred_element_type=jnp.float32)          # (bs*c, Tp) f32

    # --- per-pixel mixture-of-experts compress/expand + residual add
    wc = wc_ref[...]      # (E*c8, c)  stacked compress weights
    weT = weT_ref[...]    # (c, E*c8)  expand weights reordered: col e*c8+j = We_e[:, j]
    for b in range(bs):
        fea_b = fea[b * c:(b + 1) * c, :]                                  # (c, Tp)
        ce = jnp.dot(wc, fea_b, preferred_element_type=jnp.float32)        # (E*c8, Tp)
        comp = routing[0:1, :] * ce[0:c8, :]
        for e in range(1, E):
            comp = comp + routing[e:e + 1, :] * ce[e * c8:(e + 1) * c8, :]  # (c8, Tp)
        # fold routing into comp (tiny VPU work), then ONE MXU matmul for the expand
        for e in range(E):
            cs_ref[e * c8:(e + 1) * c8, :] = routing[e:e + 1, :] * comp     # (E*c8, Tp)
        out_b = jnp.dot(weT, cs_ref[...], preferred_element_type=jnp.float32)  # (c, Tp)
        out_ref[b * c:(b + 1) * c, :] = out_b + fea_b           # residual (+fea0)


def _full(a):
    return pl.BlockSpec(a.shape, lambda i: (0, 0))


def meta_upsample(x, scale, params):
    bs, c, h, w = x.shape
    assert c % 8 == 0, "channels must be a multiple of 8 (channels//8 compress dim)"
    H = int(round(h * scale))
    W = int(round(w * scale))
    P = H * W
    E = params["weight_compress"].shape[0]
    c8 = params["weight_compress"].shape[1]
    hidden = params["w2"].shape[0]

    # Per-pixel meta inputs, channel-major, pixels flattened in NCHW (row-major) order.
    i_h = jnp.arange(H, dtype=jnp.float32)
    i_w = jnp.arange(W, dtype=jnp.float32)
    coor_h = (i_h + 0.5) / scale - jnp.floor((i_h + 0.5) / scale + 0.001) - 0.5
    coor_w = (i_w + 0.5) / scale - jnp.floor((i_w + 0.5) / scale + 0.001) - 0.5
    base_y = (i_h + 0.5) / scale - 0.5   # align_corners=True un-normalization
    base_x = (i_w + 0.5) / scale - 0.5
    inp_cm = jnp.stack([
        jnp.full((H, W), 1.0 / scale, jnp.float32),
        jnp.broadcast_to(coor_h[:, None], (H, W)),
        jnp.broadcast_to(coor_w[None, :], (H, W)),
        jnp.broadcast_to(base_x[None, :], (H, W)),
        jnp.broadcast_to(base_y[:, None], (H, W)),
    ], axis=0).reshape(5, P)

    # Source-pixel coordinate columns (only h*w unique values -> hoisted out of kernel).
    ky_src, kx_src = jnp.meshgrid(jnp.arange(h, dtype=jnp.float32),
                                  jnp.arange(w, dtype=jnp.float32), indexing="ij")
    kx_src = kx_src.reshape(h * w, 1)
    ky_src = ky_src.reshape(h * w, 1)

    # bf16 source image for the grid-sample MXU matmul (f32 accumulation in-kernel).
    x_cm = x.reshape(bs * c, h * w).astype(jnp.bfloat16)

    # routing + offset heads fused, padded to 8 rows for an aligned sublane tile.
    nh = E + 2
    nhp = ((nh + 7) // 8) * 8
    who = jnp.concatenate([params["wr"], params["wo"],
                           jnp.zeros((nhp - nh, hidden), jnp.float32)], axis=0)
    bho = jnp.concatenate([params["br"], params["bo"],
                           jnp.zeros((nhp - nh, 1), jnp.float32)], axis=0)

    wc_stack = params["weight_compress"].reshape(E * c8, c)                  # (E*c8, c)
    weT_stack = jnp.transpose(params["weight_expand"], (1, 0, 2)).reshape(c, E * c8)

    tile_p = _pick_tile(P)
    kernel = partial(_meta_upsample_kernel, num_experts=E, bs=bs, c=c, c8=c8)

    # Per-tile VMEM estimate (double-buffered pipelined blocks + resident invariants +
    # in-kernel intermediates) -> explicit scoped VMEM limit with headroom.
    vmem_est = (2 * 5 * tile_p * 4                    # meta input blocks
                + 2 * bs * c * tile_p * 4             # output blocks
                + 2 * x_cm.size * 2                   # resident bf16 source image
                + (h * w) * tile_p * 6                # wbil (f32 build + bf16 copy)
                + (bs * c + 8 * hidden) * tile_p * 4  # fea / hidden intermediates
                + (2 << 20))                          # weights, kx/ky, slack
    vmem_limit = int(min(max(2 * vmem_est, 32 << 20), 64 << 20))

    out_flat = pl.pallas_call(
        kernel,
        out_shape=jax.ShapeDtypeStruct((bs * c, P), jnp.float32),
        grid_spec=pltpu.PrefetchScalarGridSpec(
            num_scalar_prefetch=0,
            grid=(pl.cdiv(P, tile_p),),
            in_specs=[pl.BlockSpec((5, tile_p), lambda i: (0, i)),
                      _full(kx_src), _full(ky_src),
                      _full(params["w1"]), _full(params["b1"]),
                      _full(params["w2"]), _full(params["b2"]),
                      _full(who), _full(bho),
                      _full(x_cm), _full(wc_stack), _full(weT_stack)],
            out_specs=pl.BlockSpec((bs * c, tile_p), lambda i: (0, i)),
            scratch_shapes=[pltpu.VMEM((E * c8, tile_p), jnp.float32)]),
        compiler_params=pltpu.CompilerParams(
            dimension_semantics=("parallel",),
            vmem_limit_bytes=vmem_limit),
    )(inp_cm, kx_src, ky_src, params["w1"], params["b1"], params["w2"], params["b2"],
      who, bho, x_cm, wc_stack, weT_stack)

    # (bs*c, P) is already NCHW memory order -> free reshape, no transpose.
    return out_flat.reshape(bs, c, H, W)


# ----------------------------------------------------------------------------------
# Pure-JAX reference (mirrors the PyTorch Meta_upsample forward) for a sanity check.
# ----------------------------------------------------------------------------------
def _reference_forward(x, scale, params):
    bs, c, h, w = x.shape
    H = int(round(h * scale))
    W = int(round(w * scale))
    P = H * W

    i_h = jnp.arange(H, dtype=jnp.float32)
    i_w = jnp.arange(W, dtype=jnp.float32)
    coor_h = (i_h + 0.5) / scale - jnp.floor((i_h + 0.5) / scale + 0.001) - 0.5
    coor_w = (i_w + 0.5) / scale - jnp.floor((i_w + 0.5) / scale + 0.001) - 0.5
    feat = jnp.stack([jnp.full((H, W), 1.0 / scale, jnp.float32),
                      jnp.broadcast_to(coor_h[:, None], (H, W)),
                      jnp.broadcast_to(coor_w[None, :], (H, W))], 0).reshape(3, P)

    h1 = jax.nn.relu(params["w1"] @ feat + params["b1"])
    h2 = jax.nn.relu(params["w2"] @ h1 + params["b2"])
    routing = jax.nn.sigmoid(params["wr"] @ h2 + params["br"])     # (E, P)
    offset = params["wo"] @ h2 + params["bo"]                      # (2, P)

    base_x = jnp.broadcast_to(((i_w + 0.5) / scale - 0.5)[None, :], (H, W)).reshape(P)
    base_y = jnp.broadcast_to(((i_h + 0.5) / scale - 0.5)[:, None], (H, W)).reshape(P)
    sx = base_x + offset[0]
    sy = base_y + offset[1]
    wx = jnp.maximum(1.0 - jnp.abs(sx[:, None] - jnp.arange(w, dtype=jnp.float32)[None, :]), 0.0)
    wy = jnp.maximum(1.0 - jnp.abs(sy[:, None] - jnp.arange(h, dtype=jnp.float32)[None, :]), 0.0)
    wbil = (wy[:, :, None] * wx[:, None, :]).reshape(P, h * w)     # (P, h*w)
    fea = jnp.einsum('pk,bck->bcp', wbil, x.reshape(bs, c, h * w))  # (bs, c, P)

    wcp = jnp.einsum('ep,eij->pij', routing, params["weight_compress"])  # (P, c8, c)
    wep = jnp.einsum('ep,eij->pij', routing, params["weight_expand"])    # (P, c, c8)
    comp = jnp.einsum('pij,bjp->bip', wcp, fea)                    # (bs, c8, P)
    out = jnp.einsum('pij,bjp->bip', wep, comp) + fea              # (bs, c, P)
    return out.reshape(bs, c, H, W)


def init_params(key, channels, num_experts=4, hidden=64):
    c8 = channels // 8
    ks = jax.random.split(key, 10)

    def u(k, shape, fan_in):
        bound = 1.0 / math.sqrt(fan_in)
        return jax.random.uniform(k, shape, jnp.float32, -bound, bound)

    return {
        "w1": u(ks[0], (hidden, 3), 3),           "b1": u(ks[1], (hidden, 1), 3),
        "w2": u(ks[2], (hidden, hidden), hidden), "b2": u(ks[3], (hidden, 1), hidden),
        "wr": u(ks[4], (num_experts, hidden), hidden),
        "br": u(ks[5], (num_experts, 1), hidden),
        "wo": u(ks[6], (2, hidden), hidden),      "bo": u(ks[7], (2, 1), hidden),
        "weight_compress": u(ks[8], (num_experts, c8, channels), channels),
        "weight_expand":   u(ks[9], (num_experts, channels, c8), c8),
    }


if __name__ == "__main__":
    key = jax.random.PRNGKey(0)
    kx_, kp_ = jax.random.split(key)

    bs, c, h, w = 2, 16, 8, 8      # channels must be a multiple of 8 (channels // 8 dim)
    scale = 2.0
    x = jax.random.normal(kx_, (bs, c, h, w), jnp.float32)
    params = init_params(kp_, c, num_experts=4, hidden=64)

    fwd = jax.jit(lambda xx: meta_upsample(xx, scale, params))
    out = jax.block_until_ready(fwd(x))

    H_out, W_out = int(round(h * scale)), int(round(w * scale))
    assert out.shape == (bs, c, H_out, W_out), out.shape
    assert bool(jnp.all(jnp.isfinite(out)))

    with jax.default_matmul_precision("float32"):
        ref = jax.block_until_ready(_reference_forward(x, scale, params))
    max_err = float(jnp.max(jnp.abs(out - ref)))
    # tolerance covers the bf16 grid-sample matmul + approx-reciprocal sigmoid
    assert max_err < 5e-2, f"mismatch vs reference: max abs err {max_err}"

    print("KERNEL_OK")
</pallas_src>

<mosaic_0001>
module attributes {stable_mosaic.version = 11 : i64} {
  func.func @_meta_upsample_kernel(%arg0: i32, %arg1: memref<5x256xf32, #tpu.memory_space<vmem>>, %arg2: memref<64x1xf32, #tpu.memory_space<vmem>>, %arg3: memref<64x1xf32, #tpu.memory_space<vmem>>, %arg4: memref<64x3xf32, #tpu.memory_space<vmem>>, %arg5: memref<64x1xf32, #tpu.memory_space<vmem>>, %arg6: memref<64x64xf32, #tpu.memory_space<vmem>>, %arg7: memref<64x1xf32, #tpu.memory_space<vmem>>, %arg8: memref<8x64xf32, #tpu.memory_space<vmem>>, %arg9: memref<8x1xf32, #tpu.memory_space<vmem>>, %arg10: memref<32x64xbf16, #tpu.memory_space<vmem>>, %arg11: memref<8x16xf32, #tpu.memory_space<vmem>>, %arg12: memref<16x8xf32, #tpu.memory_space<vmem>>, %arg13: memref<32x256xf32, #tpu.memory_space<vmem>>, %arg14: memref<8x256xf32, #tpu.memory_space<vmem>>) attributes {dimension_semantics = [#tpu.dimension_semantics<parallel>], iteration_bounds = array<i64: 1>, scalar_prefetch = 0 : i64, scratch_operands = 1 : i64, tpu.core_type = #tpu.core_type<tc>, window_params = [{transform_indices = @transform_0, window_bounds = array<i64: 5, 256>}, {pipeline_mode = #tpu.pipeline_mode<synchronous>, transform_indices = @transform_1, window_bounds = array<i64: 64, 1>}, {pipeline_mode = #tpu.pipeline_mode<synchronous>, transform_indices = @transform_2, window_bounds = array<i64: 64, 1>}, {pipeline_mode = #tpu.pipeline_mode<synchronous>, transform_indices = @transform_3, window_bounds = array<i64: 64, 3>}, {pipeline_mode = #tpu.pipeline_mode<synchronous>, transform_indices = @transform_4, window_bounds = array<i64: 64, 1>}, {pipeline_mode = #tpu.pipeline_mode<synchronous>, transform_indices = @transform_5, window_bounds = array<i64: 64, 64>}, {pipeline_mode = #tpu.pipeline_mode<synchronous>, transform_indices = @transform_6, window_bounds = array<i64: 64, 1>}, {pipeline_mode = #tpu.pipeline_mode<synchronous>, transform_indices = @transform_7, window_bounds = array<i64: 8, 64>}, {pipeline_mode = #tpu.pipeline_mode<synchronous>, transform_indices = @transform_8, window_bounds = array<i64: 8, 1>}, {pipeline_mode = #tpu.pipeline_mode<synchronous>, transform_indices = @transform_9, window_bounds = array<i64: 32, 64>}, {pipeline_mode = #tpu.pipeline_mode<synchronous>, transform_indices = @transform_10, window_bounds = array<i64: 8, 16>}, {pipeline_mode = #tpu.pipeline_mode<synchronous>, transform_indices = @transform_11, window_bounds = array<i64: 16, 8>}, {transform_indices = @transform_12, window_bounds = array<i64: 32, 256>}]} {
    %c0 = arith.constant 0 : index
    %c0_0 = arith.constant 0 : index
    %0 = vector.load %arg1[%c0, %c0_0] : memref<5x256xf32, #tpu.memory_space<vmem>>, vector<5x256xf32>
    %1 = vector.extract_strided_slice %0 {offsets = [0, 0], sizes = [3, 256], strides = [1, 1]} : vector<5x256xf32> to vector<3x256xf32>
    %2 = vector.extract_strided_slice %0 {offsets = [3, 0], sizes = [1, 256], strides = [1, 1]} : vector<5x256xf32> to vector<1x256xf32>
    %3 = vector.extract_strided_slice %0 {offsets = [4, 0], sizes = [1, 256], strides = [1, 1]} : vector<5x256xf32> to vector<1x256xf32>
    %c0_1 = arith.constant 0 : index
    %c0_2 = arith.constant 0 : index
    %4 = vector.load %arg5[%c0_1, %c0_2] : memref<64x1xf32, #tpu.memory_space<vmem>>, vector<64x1xf32>
    %c0_3 = arith.constant 0 : index
    %c0_4 = arith.constant 0 : index
    %5 = vector.load %arg4[%c0_3, %c0_4] : memref<64x3xf32, #tpu.memory_space<vmem>>, vector<64x1xf32>
    %6 = vector.extract_strided_slice %1 {offsets = [0, 0], sizes = [1, 256], strides = [1, 1]} : vector<3x256xf32> to vector<1x256xf32>
    %7 = vector.broadcast %5 : vector<64x1xf32> to vector<64x256xf32>
    %8 = vector.broadcast %6 : vector<1x256xf32> to vector<64x256xf32>
    %9 = arith.mulf %7, %8 : vector<64x256xf32>
    %10 = vector.broadcast %4 : vector<64x1xf32> to vector<64x256xf32>
    %11 = arith.addf %10, %9 : vector<64x256xf32>
    %c0_5 = arith.constant 0 : index
    %c1 = arith.constant 1 : index
    %12 = vector.load %arg4[%c0_5, %c1] : memref<64x3xf32, #tpu.memory_space<vmem>>, vector<64x1xf32>
    %13 = vector.extract_strided_slice %1 {offsets = [1, 0], sizes = [1, 256], strides = [1, 1]} : vector<3x256xf32> to vector<1x256xf32>
    %14 = vector.broadcast %12 : vector<64x1xf32> to vector<64x256xf32>
    %15 = vector.broadcast %13 : vector<1x256xf32> to vector<64x256xf32>
    %16 = arith.mulf %14, %15 : vector<64x256xf32>
    %17 = arith.addf %11, %16 : vector<64x256xf32>
    %c0_6 = arith.constant 0 : index
    %c2 = arith.constant 2 : index
    %18 = vector.load %arg4[%c0_6, %c2] : memref<64x3xf32, #tpu.memory_space<vmem>>, vector<64x1xf32>
    %19 = vector.extract_strided_slice %1 {offsets = [2, 0], sizes = [1, 256], strides = [1, 1]} : vector<3x256xf32> to vector<1x256xf32>
    %20 = vector.broadcast %18 : vector<64x1xf32> to vector<64x256xf32>
    %21 = vector.broadcast %19 : vector<1x256xf32> to vector<64x256xf32>
    %22 = arith.mulf %20, %21 : vector<64x256xf32>
    %23 = arith.addf %17, %22 : vector<64x256xf32>
    %cst = arith.constant 0.000000e+00 : f32
    %24 = vector.broadcast %cst : f32 to vector<64x256xf32>
    %25 = arith.maximumf %23, %24 : vector<64x256xf32>
    %c0_7 = arith.constant 0 : index
    %c0_8 = arith.constant 0 : index
    %26 = vector.load %arg6[%c0_7, %c0_8] : memref<64x64xf32, #tpu.memory_space<vmem>>, vector<64x64xf32>
    %cst_9 = arith.constant dense<0.000000e+00> : vector<64x256xf32>
    %27 = tpu.matmul %26, %25, %cst_9 {dimension_numbers = #tpu.dot_dimension_numbers<[1], [0], [0], [1], [0, 0, 1, 1], [], []>} : vector<64x64xf32>, vector<64x256xf32>, vector<64x256xf32> -> vector<64x256xf32>
    %c0_10 = arith.constant 0 : index
    %c0_11 = arith.constant 0 : index
    %28 = vector.load %arg7[%c0_10, %c0_11] : memref<64x1xf32, #tpu.memory_space<vmem>>, vector<64x1xf32>
    %29 = vector.broadcast %28 : vector<64x1xf32> to vector<64x256xf32>
    %30 = arith.addf %27, %29 : vector<64x256xf32>
    %cst_12 = arith.constant 0.000000e+00 : f32
    %31 = vector.broadcast %cst_12 : f32 to vector<64x256xf32>
    %32 = arith.maximumf %30, %31 : vector<64x256xf32>
    %c0_13 = arith.constant 0 : index
    %c0_14 = arith.constant 0 : index
    %33 = vector.load %arg8[%c0_13, %c0_14] : memref<8x64xf32, #tpu.memory_space<vmem>>, vector<8x64xf32>
    %cst_15 = arith.constant dense<0.000000e+00> : vector<8x256xf32>
    %34 = tpu.matmul %33, %32, %cst_15 {dimension_numbers = #tpu.dot_dimension_numbers<[1], [0], [0], [1], [0, 0, 1, 1], [], []>} : vector<8x64xf32>, vector<64x256xf32>, vector<8x256xf32> -> vector<8x256xf32>
    %c0_16 = arith.constant 0 : index
    %c0_17 = arith.constant 0 : index
    %35 = vector.load %arg9[%c0_16, %c0_17] : memref<8x1xf32, #tpu.memory_space<vmem>>, vector<8x1xf32>
    %36 = vector.broadcast %35 : vector<8x1xf32> to vector<8x256xf32>
    %37 = arith.addf %34, %36 : vector<8x256xf32>
    %38 = vector.extract_strided_slice %37 {offsets = [0, 0], sizes = [4, 256], strides = [1, 1]} : vector<8x256xf32> to vector<4x256xf32>
    %cst_18 = arith.constant 0.000000e+00 : f32
    %39 = vector.broadcast %cst_18 : f32 to vector<4x256xf32>
    %40 = arith.subf %39, %38 : vector<4x256xf32>
    %41 = math.exp %40 : vector<4x256xf32>
    %cst_19 = arith.constant 1.000000e+00 : f32
    %42 = vector.broadcast %cst_19 : f32 to vector<4x256xf32>
    %43 = arith.addf %42, %41 : vector<4x256xf32>
    %44 = tpu.reciprocal %43 {approx = true} : vector<4x256xf32> -> vector<4x256xf32>
    %45 = vector.extract_strided_slice %37 {offsets = [4, 0], sizes = [1, 256], strides = [1, 1]} : vector<8x256xf32> to vector<1x256xf32>
    %46 = vector.extract_strided_slice %37 {offsets = [5, 0], sizes = [1, 256], strides = [1, 1]} : vector<8x256xf32> to vector<1x256xf32>
    %47 = arith.addf %2, %45 : vector<1x256xf32>
    %48 = arith.addf %3, %46 : vector<1x256xf32>
    %c0_20 = arith.constant 0 : index
    %c0_21 = arith.constant 0 : index
    %49 = vector.load %arg2[%c0_20, %c0_21] : memref<64x1xf32, #tpu.memory_space<vmem>>, vector<64x1xf32>
    %c0_22 = arith.constant 0 : index
    %c0_23 = arith.constant 0 : index
    %50 = vector.load %arg3[%c0_22, %c0_23] : memref<64x1xf32, #tpu.memory_space<vmem>>, vector<64x1xf32>
    %51 = vector.broadcast %49 : vector<64x1xf32> to vector<64x256xf32>
    %52 = vector.broadcast %47 : vector<1x256xf32> to vector<64x256xf32>
    %53 = arith.subf %51, %52 : vector<64x256xf32>
    %54 = math.absf %53 : vector<64x256xf32>
    %cst_24 = arith.constant 1.000000e+00 : f32
    %55 = vector.broadcast %cst_24 : f32 to vector<64x256xf32>
    %56 = arith.subf %55, %54 : vector<64x256xf32>
    %cst_25 = arith.constant 0.000000e+00 : f32
    %57 = vector.broadcast %cst_25 : f32 to vector<64x256xf32>
    %58 = arith.maximumf %56, %57 : vector<64x256xf32>
    %59 = vector.broadcast %50 : vector<64x1xf32> to vector<64x256xf32>
    %60 = vector.broadcast %48 : vector<1x256xf32> to vector<64x256xf32>
    %61 = arith.subf %59, %60 : vector<64x256xf32>
    %62 = math.absf %61 : vector<64x256xf32>
    %cst_26 = arith.constant 1.000000e+00 : f32
    %63 = vector.broadcast %cst_26 : f32 to vector<64x256xf32>
    %64 = arith.subf %63, %62 : vector<64x256xf32>
    %cst_27 = arith.constant 0.000000e+00 : f32
    %65 = vector.broadcast %cst_27 : f32 to vector<64x256xf32>
    %66 = arith.maximumf %64, %65 : vector<64x256xf32>
    %67 = arith.mulf %58, %66 : vector<64x256xf32>
    %68 = arith.truncf %67 : vector<64x256xf32> to vector<64x256xbf16>
    %c0_28 = arith.constant 0 : index
    %c0_29 = arith.constant 0 : index
    %69 = vector.load %arg10[%c0_28, %c0_29] : memref<32x64xbf16, #tpu.memory_space<vmem>>, vector<32x64xbf16>
    %cst_30 = arith.constant dense<0.000000e+00> : vector<32x256xf32>
    %70 = tpu.matmul %69, %68, %cst_30 {dimension_numbers = #tpu.dot_dimension_numbers<[1], [0], [0], [1], [0, 0, 1, 1], [], []>} : vector<32x64xbf16>, vector<64x256xbf16>, vector<32x256xf32> -> vector<32x256xf32>
    %c0_31 = arith.constant 0 : index
    %c0_32 = arith.constant 0 : index
    %71 = vector.load %arg11[%c0_31, %c0_32] : memref<8x16xf32, #tpu.memory_space<vmem>>, vector<8x16xf32>
    %c0_33 = arith.constant 0 : index
    %c0_34 = arith.constant 0 : index
    %72 = vector.load %arg12[%c0_33, %c0_34] : memref<16x8xf32, #tpu.memory_space<vmem>>, vector<16x8xf32>
    %73 = vector.extract_strided_slice %70 {offsets = [0, 0], sizes = [16, 256], strides = [1, 1]} : vector<32x256xf32> to vector<16x256xf32>
    %cst_35 = arith.constant dense<0.000000e+00> : vector<8x256xf32>
    %74 = tpu.matmul %71, %73, %cst_35 {dimension_numbers = #tpu.dot_dimension_numbers<[1], [0], [0], [1], [0, 0, 1, 1], [], []>} : vector<8x16xf32>, vector<16x256xf32>, vector<8x256xf32> -> vector<8x256xf32>
    %75 = vector.extract_strided_slice %44 {offsets = [0, 0], sizes = [1, 256], strides = [1, 1]} : vector<4x256xf32> to vector<1x256xf32>
    %76 = vector.extract_strided_slice %74 {offsets = [0, 0], sizes = [2, 256], strides = [1, 1]} : vector<8x256xf32> to vector<2x256xf32>
    %77 = vector.broadcast %75 : vector<1x256xf32> to vector<2x256xf32>
    %78 = arith.mulf %77, %76 : vector<2x256xf32>
    %79 = vector.extract_strided_slice %44 {offsets = [1, 0], sizes = [1, 256], strides = [1, 1]} : vector<4x256xf32> to vector<1x256xf32>
    %80 = vector.extract_strided_slice %74 {offsets = [2, 0], sizes = [2, 256], strides = [1, 1]} : vector<8x256xf32> to vector<2x256xf32>
    %81 = vector.broadcast %79 : vector<1x256xf32> to vector<2x256xf32>
    %82 = arith.mulf %81, %80 : vector<2x256xf32>
    %83 = arith.addf %78, %82 : vector<2x256xf32>
    %84 = vector.extract_strided_slice %44 {offsets = [2, 0], sizes = [1, 256], strides = [1, 1]} : vector<4x256xf32> to vector<1x256xf32>
    %85 = vector.extract_strided_slice %74 {offsets = [4, 0], sizes = [2, 256], strides = [1, 1]} : vector<8x256xf32> to vector<2x256xf32>
    %86 = vector.broadcast %84 : vector<1x256xf32> to vector<2x256xf32>
    %87 = arith.mulf %86, %85 : vector<2x256xf32>
    %88 = arith.addf %83, %87 : vector<2x256xf32>
    %89 = vector.extract_strided_slice %44 {offsets = [3, 0], sizes = [1, 256], strides = [1, 1]} : vector<4x256xf32> to vector<1x256xf32>
    %90 = vector.extract_strided_slice %74 {offsets = [6, 0], sizes = [2, 256], strides = [1, 1]} : vector<8x256xf32> to vector<2x256xf32>
    %91 = vector.broadcast %89 : vector<1x256xf32> to vector<2x256xf32>
    %92 = arith.mulf %91, %90 : vector<2x256xf32>
    %93 = arith.addf %88, %92 : vector<2x256xf32>
    %94 = vector.extract_strided_slice %44 {offsets = [0, 0], sizes = [1, 256], strides = [1, 1]} : vector<4x256xf32> to vector<1x256xf32>
    %95 = vector.broadcast %94 : vector<1x256xf32> to vector<2x256xf32>
    %96 = arith.mulf %95, %93 : vector<2x256xf32>
    %c0_36 = arith.constant 0 : index
    %c0_37 = arith.constant 0 : index
    %97 = vector.load %arg14[%c0_36, %c0_37] : memref<8x256xf32, #tpu.memory_space<vmem>>, vector<2x256xf32>
    tpu.vector_store %arg14[%c0_36, %c0_37], %96 {strides = array<i32>} : memref<8x256xf32, #tpu.memory_space<vmem>>, vector<2x256xf32>,
    %98 = vector.extract_strided_slice %44 {offsets = [1, 0], sizes = [1, 256], strides = [1, 1]} : vector<4x256xf32> to vector<1x256xf32>
    %99 = vector.broadcast %98 : vector<1x256xf32> to vector<2x256xf32>
    %100 = arith.mulf %99, %93 : vector<2x256xf32>
    %c2_38 = arith.constant 2 : index
    %c0_39 = arith.constant 0 : index
    %101 = vector.load %arg14[%c2_38, %c0_39] : memref<8x256xf32, #tpu.memory_space<vmem>>, vector<2x256xf32>
    tpu.vector_store %arg14[%c2_38, %c0_39], %100 {strides = array<i32>} : memref<8x256xf32, #tpu.memory_space<vmem>>, vector<2x256xf32>,
    %102 = vector.extract_strided_slice %44 {offsets = [2, 0], sizes = [1, 256], strides = [1, 1]} : vector<4x256xf32> to vector<1x256xf32>
    %103 = vector.broadcast %102 : vector<1x256xf32> to vector<2x256xf32>
    %104 = arith.mulf %103, %93 : vector<2x256xf32>
    %c4 = arith.constant 4 : index
    %c0_40 = arith.constant 0 : index
    %105 = vector.load %arg14[%c4, %c0_40] : memref<8x256xf32, #tpu.memory_space<vmem>>, vector<2x256xf32>
    tpu.vector_store %arg14[%c4, %c0_40], %104 {strides = array<i32>} : memref<8x256xf32, #tpu.memory_space<vmem>>, vector<2x256xf32>,
    %106 = vector.extract_strided_slice %44 {offsets = [3, 0], sizes = [1, 256], strides = [1, 1]} : vector<4x256xf32> to vector<1x256xf32>
    %107 = vector.broadcast %106 : vector<1x256xf32> to vector<2x256xf32>
    %108 = arith.mulf %107, %93 : vector<2x256xf32>
    %c6 = arith.constant 6 : index
    %c0_41 = arith.constant 0 : index
    %109 = vector.load %arg14[%c6, %c0_41] : memref<8x256xf32, #tpu.memory_space<vmem>>, vector<2x256xf32>
    tpu.vector_store %arg14[%c6, %c0_41], %108 {strides = array<i32>} : memref<8x256xf32, #tpu.memory_space<vmem>>, vector<2x256xf32>,
    %c0_42 = arith.constant 0 : index
    %c0_43 = arith.constant 0 : index
    %110 = vector.load %arg14[%c0_42, %c0_43] : memref<8x256xf32, #tpu.memory_space<vmem>>, vector<8x256xf32>
    %cst_44 = arith.constant dense<0.000000e+00> : vector<16x256xf32>
    %111 = tpu.matmul %72, %110, %cst_44 {dimension_numbers = #tpu.dot_dimension_numbers<[1], [0], [0], [1], [0, 0, 1, 1], [], []>} : vector<16x8xf32>, vector<8x256xf32>, vector<16x256xf32> -> vector<16x256xf32>
    %112 = arith.addf %111, %73 : vector<16x256xf32>
    %c0_45 = arith.constant 0 : index
    %c0_46 = arith.constant 0 : index
    %113 = vector.load %arg13[%c0_45, %c0_46] : memref<32x256xf32, #tpu.memory_space<vmem>>, vector<16x256xf32>
    tpu.vector_store %arg13[%c0_45, %c0_46], %112 {strides = array<i32>} : memref<32x256xf32, #tpu.memory_space<vmem>>, vector<16x256xf32>,
    %114 = vector.extract_strided_slice %70 {offsets = [16, 0], sizes = [16, 256], strides = [1, 1]} : vector<32x256xf32> to vector<16x256xf32>
    %cst_47 = arith.constant dense<0.000000e+00> : vector<8x256xf32>
    %115 = tpu.matmul %71, %114, %cst_47 {dimension_numbers = #tpu.dot_dimension_numbers<[1], [0], [0], [1], [0, 0, 1, 1], [], []>} : vector<8x16xf32>, vector<16x256xf32>, vector<8x256xf32> -> vector<8x256xf32>
    %116 = vector.extract_strided_slice %44 {offsets = [0, 0], sizes = [1, 256], strides = [1, 1]} : vector<4x256xf32> to vector<1x256xf32>
    %117 = vector.extract_strided_slice %115 {offsets = [0, 0], sizes = [2, 256], strides = [1, 1]} : vector<8x256xf32> to vector<2x256xf32>
    %118 = vector.broadcast %116 : vector<1x256xf32> to vector<2x256xf32>
    %119 = arith.mulf %118, %117 : vector<2x256xf32>
    %120 = vector.extract_strided_slice %44 {offsets = [1, 0], sizes = [1, 256], strides = [1, 1]} : vector<4x256xf32> to vector<1x256xf32>
    %121 = vector.extract_strided_slice %115 {offsets = [2, 0], sizes = [2, 256], strides = [1, 1]} : vector<8x256xf32> to vector<2x256xf32>
    %122 = vector.broadcast %120 : vector<1x256xf32> to vector<2x256xf32>
    %123 = arith.mulf %122, %121 : vector<2x256xf32>
    %124 = arith.addf %119, %123 : vector<2x256xf32>
    %125 = vector.extract_strided_slice %44 {offsets = [2, 0], sizes = [1, 256], strides = [1, 1]} : vector<4x256xf32> to vector<1x256xf32>
    %126 = vector.extract_strided_slice %115 {offsets = [4, 0], sizes = [2, 256], strides = [1, 1]} : vector<8x256xf32> to vector<2x256xf32>
    %127 = vector.broadcast %125 : vector<1x256xf32> to vector<2x256xf32>
    %128 = arith.mulf %127, %126 : vector<2x256xf32>
    %129 = arith.addf %124, %128 : vector<2x256xf32>
    %130 = vector.extract_strided_slice %44 {offsets = [3, 0], sizes = [1, 256], strides = [1, 1]} : vector<4x256xf32> to vector<1x256xf32>
    %131 = vector.extract_strided_slice %115 {offsets = [6, 0], sizes = [2, 256], strides = [1, 1]} : vector<8x256xf32> to vector<2x256xf32>
    %132 = vector.broadcast %130 : vector<1x256xf32> to vector<2x256xf32>
    %133 = arith.mulf %132, %131 : vector<2x256xf32>
    %134 = arith.addf %129, %133 : vector<2x256xf32>
    %135 = vector.extract_strided_slice %44 {offsets = [0, 0], sizes = [1, 256], strides = [1, 1]} : vector<4x256xf32> to vector<1x256xf32>
    %136 = vector.broadcast %135 : vector<1x256xf32> to vector<2x256xf32>
    %137 = arith.mulf %136, %134 : vector<2x256xf32>
    %c0_48 = arith.constant 0 : index
    %c0_49 = arith.constant 0 : index
    %138 = vector.load %arg14[%c0_48, %c0_49] : memref<8x256xf32, #tpu.memory_space<vmem>>, vector<2x256xf32>
    tpu.vector_store %arg14[%c0_48, %c0_49], %137 {strides = array<i32>} : memref<8x256xf32, #tpu.memory_space<vmem>>, vector<2x256xf32>,
    %139 = vector.extract_strided_slice %44 {offsets = [1, 0], sizes = [1, 256], strides = [1, 1]} : vector<4x256xf32> to vector<1x256xf32>
    %140 = vector.broadcast %139 : vector<1x256xf32> to vector<2x256xf32>
    %141 = arith.mulf %140, %134 : vector<2x256xf32>
    %c2_50 = arith.constant 2 : index
    %c0_51 = arith.constant 0 : index
    %142 = vector.load %arg14[%c2_50, %c0_51] : memref<8x256xf32, #tpu.memory_space<vmem>>, vector<2x256xf32>
    tpu.vector_store %arg14[%c2_50, %c0_51], %141 {strides = array<i32>} : memref<8x256xf32, #tpu.memory_space<vmem>>, vector<2x256xf32>,
    %143 = vector.extract_strided_slice %44 {offsets = [2, 0], sizes = [1, 256], strides = [1, 1]} : vector<4x256xf32> to vector<1x256xf32>
    %144 = vector.broadcast %143 : vector<1x256xf32> to vector<2x256xf32>
    %145 = arith.mulf %144, %134 : vector<2x256xf32>
    %c4_52 = arith.constant 4 : index
    %c0_53 = arith.constant 0 : index
    %146 = vector.load %arg14[%c4_52, %c0_53] : memref<8x256xf32, #tpu.memory_space<vmem>>, vector<2x256xf32>
    tpu.vector_store %arg14[%c4_52, %c0_53], %145 {strides = array<i32>} : memref<8x256xf32, #tpu.memory_space<vmem>>, vector<2x256xf32>,
    %147 = vector.extract_strided_slice %44 {offsets = [3, 0], sizes = [1, 256], strides = [1, 1]} : vector<4x256xf32> to vector<1x256xf32>
    %148 = vector.broadcast %147 : vector<1x256xf32> to vector<2x256xf32>
    %149 = arith.mulf %148, %134 : vector<2x256xf32>
    %c6_54 = arith.constant 6 : index
    %c0_55 = arith.constant 0 : index
    %150 = vector.load %arg14[%c6_54, %c0_55] : memref<8x256xf32, #tpu.memory_space<vmem>>, vector<2x256xf32>
    tpu.vector_store %arg14[%c6_54, %c0_55], %149 {strides = array<i32>} : memref<8x256xf32, #tpu.memory_space<vmem>>, vector<2x256xf32>,
    %c0_56 = arith.constant 0 : index
    %c0_57 = arith.constant 0 : index
    %151 = vector.load %arg14[%c0_56, %c0_57] : memref<8x256xf32, #tpu.memory_space<vmem>>, vector<8x256xf32>
    %cst_58 = arith.constant dense<0.000000e+00> : vector<16x256xf32>
    %152 = tpu.matmul %72, %151, %cst_58 {dimension_numbers = #tpu.dot_dimension_numbers<[1], [0], [0], [1], [0, 0, 1, 1], [], []>} : vector<16x8xf32>, vector<8x256xf32>, vector<16x256xf32> -> vector<16x256xf32>
    %153 = arith.addf %152, %114 : vector<16x256xf32>
    %c16 = arith.constant 16 : index
    %c0_59 = arith.constant 0 : index
    %154 = vector.load %arg13[%c16, %c0_59] : memref<32x256xf32, #tpu.memory_space<vmem>>, vector<16x256xf32>
    tpu.vector_store %arg13[%c16, %c0_59], %153 {strides = array<i32>} : memref<32x256xf32, #tpu.memory_space<vmem>>, vector<16x256xf32>,
    return
  }
  func.func @transform_0(%arg0: i32) -> (i32, i32) {
    %c0_i32 = arith.constant 0 : i32
    %c0_i32_0 = arith.constant 0 : i32
    return %c0_i32, %arg0 : i32, i32
  }
  func.func @transform_1(%arg0: i32) -> (i32, i32) {
    %c0_i32 = arith.constant 0 : i32
    %c0_i32_0 = arith.constant 0 : i32
    %c0_i32_1 = arith.constant 0 : i32
    return %c0_i32, %c0_i32_0 : i32, i32
  }
  func.func @transform_2(%arg0: i32) -> (i32, i32) {
    %c0_i32 = arith.constant 0 : i32
    %c0_i32_0 = arith.constant 0 : i32
    %c0_i32_1 = arith.constant 0 : i32
    return %c0_i32, %c0_i32_0 : i32, i32
  }
  func.func @transform_3(%arg0: i32) -> (i32, i32) {
    %c0_i32 = arith.constant 0 : i32
    %c0_i32_0 = arith.constant 0 : i32
    %c0_i32_1 = arith.constant 0 : i32
    return %c0_i32, %c0_i32_0 : i32, i32
  }
  func.func @transform_4(%arg0: i32) -> (i32, i32) {
    %c0_i32 = arith.constant 0 : i32
    %c0_i32_0 = arith.constant 0 : i32
    %c0_i32_1 = arith.constant 0 : i32
    return %c0_i32, %c0_i32_0 : i32, i32
  }
  func.func @transform_5(%arg0: i32) -> (i32, i32) {
    %c0_i32 = arith.constant 0 : i32
    %c0_i32_0 = arith.constant 0 : i32
    %c0_i32_1 = arith.constant 0 : i32
    return %c0_i32, %c0_i32_0 : i32, i32
  }
  func.func @transform_6(%arg0: i32) -> (i32, i32) {
    %c0_i32 = arith.constant 0 : i32
    %c0_i32_0 = arith.constant 0 : i32
    %c0_i32_1 = arith.constant 0 : i32
    return %c0_i32, %c0_i32_0 : i32, i32
  }
  func.func @transform_7(%arg0: i32) -> (i32, i32) {
    %c0_i32 = arith.constant 0 : i32
    %c0_i32_0 = arith.constant 0 : i32
    %c0_i32_1 = arith.constant 0 : i32
    return %c0_i32, %c0_i32_0 : i32, i32
  }
  func.func @transform_8(%arg0: i32) -> (i32, i32) {
    %c0_i32 = arith.constant 0 : i32
    %c0_i32_0 = arith.constant 0 : i32
    %c0_i32_1 = arith.constant 0 : i32
    return %c0_i32, %c0_i32_0 : i32, i32
  }
  func.func @transform_9(%arg0: i32) -> (i32, i32) {
    %c0_i32 = arith.constant 0 : i32
    %c0_i32_0 = arith.constant 0 : i32
    %c0_i32_1 = arith.constant 0 : i32
    return %c0_i32, %c0_i32_0 : i32, i32
  }
  func.func @transform_10(%arg0: i32) -> (i32, i32) {
    %c0_i32 = arith.constant 0 : i32
    %c0_i32_0 = arith.constant 0 : i32
    %c0_i32_1 = arith.constant 0 : i32
    return %c0_i32, %c0_i32_0 : i32, i32
  }
  func.func @transform_11(%arg0: i32) -> (i32, i32) {
    %c0_i32 = arith.constant 0 : i32
    %c0_i32_0 = arith.constant 0 : i32
    %c0_i32_1 = arith.constant 0 : i32
    return %c0_i32, %c0_i32_0 : i32, i32
  }
  func.func @transform_12(%arg0: i32) -> (i32, i32) {
    %c0_i32 = arith.constant 0 : i32
    %c0_i32_0 = arith.constant 0 : i32
    return %c0_i32, %arg0 : i32, i32
  }
}

</mosaic_0001>

<llo_original>
// kernel: _lambda_.1
$region0: #{_lambda_.1}
  #allocation0 [shape = 'u32[]', space=smem, size = 0x4, offset = 0x4, fixed_abs, tag = 'smem constant byte address 0x4 - core index']
  #allocation1 [shape = 'u32[72,128]{1,0:T(1,128)}', space=vmem, size = 0x9000, scoped, tag = 'internal scratch']
  #allocation2 [shape = 'f32[8,256]{1,0:T(8,128)}', space=vmem, size = 0x2000, scoped, tag = 'scratch operand']
  %s0 = inlined_call_operand.vmem [shape: f32[5,256], index: 0, kind: input, shape index: {}]
  %s1 = inlined_call_operand.vmem [shape: f32[64,1], index: 1, kind: input, shape index: {}]
  %s2 = inlined_call_operand.vmem [shape: f32[64,1], index: 2, kind: input, shape index: {}]
  %s3 = inlined_call_operand.vmem [shape: f32[64,3], index: 3, kind: input, shape index: {}]
  %s4 = inlined_call_operand.vmem [shape: f32[64,1], index: 4, kind: input, shape index: {}]
  %s5 = inlined_call_operand.vmem [shape: f32[64,64], index: 5, kind: input, shape index: {}]
  %s6 = inlined_call_operand.vmem [shape: f32[64,1], index: 6, kind: input, shape index: {}]
  %s7 = inlined_call_operand.vmem [shape: f32[8,64], index: 7, kind: input, shape index: {}]
  %s8 = inlined_call_operand.vmem [shape: f32[8,1], index: 8, kind: input, shape index: {}]
  %s9 = inlined_call_operand.vmem [shape: bf16[32,64], index: 9, kind: input, shape index: {}]
  %s10 = inlined_call_operand.vmem [shape: f32[8,16], index: 10, kind: input, shape index: {}]
  %s11 = inlined_call_operand.vmem [shape: f32[16,8], index: 11, kind: input, shape index: {}]
  %s12 = inlined_call_operand.vmem [shape: f32[32,256], index: 12, kind: output, shape index: {}]
  %s13 = sld [smem:[#allocation0]]
  $region58: #{_lambda_.1} parent=0
    _
  %s15 = ssub.s32 1, %s13
  %s16 = scalar_select 0, %s15, %s13
  // Predicated region
  $region2: #{_lambda_.1} parent=0 // pred_check
    _
  $region3: #{_lambda_.1} parent=0 // pred_check_branch
    %18 = sbr.rel (0) target = $region5
  $region4: #{_lambda_.1} parent=0 // pred_region
    _
  $region5: #{_lambda_.1} parent=0 // pred_fallthru
    _
  // Predicated region
  $region6: #{_lambda_.1} parent=0 // pred_check
    _
  $region7: #{_lambda_.1} parent=0 // pred_check_branch
    %20 = sbr.rel (0) target = $region9
  $region8: #{_lambda_.1} parent=0 // pred_region
    _
  $region9: #{_lambda_.1} parent=0 // pred_fallthru
    _
  // Predicated region
  $region10: #{_lambda_.1} parent=0 // pred_check
    _
  $region11: #{_lambda_.1} parent=0 // pred_check_branch
    %22 = sbr.rel (0) target = $region13
  $region12: #{_lambda_.1} parent=0 // pred_region
    _
  $region13: #{_lambda_.1} parent=0 // pred_fallthru
    _
  // Predicated region
  $region14: #{_lambda_.1} parent=0 // pred_check
    _
  $region15: #{_lambda_.1} parent=0 // pred_check_branch
    %24 = sbr.rel (0) target = $region17
  $region16: #{_lambda_.1} parent=0 // pred_region
    _
  $region17: #{_lambda_.1} parent=0 // pred_fallthru
    _
  // Predicated region
  $region18: #{_lambda_.1} parent=0 // pred_check
    _
  $region19: #{_lambda_.1} parent=0 // pred_check_branch
    %26 = sbr.rel (0) target = $region21
  $region20: #{_lambda_.1} parent=0 // pred_region
    _
  $region21: #{_lambda_.1} parent=0 // pred_fallthru
    _
  // Predicated region
  $region22: #{_lambda_.1} parent=0 // pred_check
    _
  $region23: #{_lambda_.1} parent=0 // pred_check_branch
    %28 = sbr.rel (0) target = $region25
  $region24: #{_lambda_.1} parent=0 // pred_region
    _
  $region25: #{_lambda_.1} parent=0 // pred_fallthru
    _
  // Predicated region
  $region26: #{_lambda_.1} parent=0 // pred_check
    _
  $region27: #{_lambda_.1} parent=0 // pred_check_branch
    %30 = sbr.rel (0) target = $region29
  $region28: #{_lambda_.1} parent=0 // pred_region
    _
  $region29: #{_lambda_.1} parent=0 // pred_fallthru
    _
  // Predicated region
  $region30: #{_lambda_.1} parent=0 // pred_check
    _
  $region31: #{_lambda_.1} parent=0 // pred_check_branch
    %32 = sbr.rel (0) target = $region33
  $region32: #{_lambda_.1} parent=0 // pred_region
    _
  $region33: #{_lambda_.1} parent=0 // pred_fallthru
    _
  // Predicated region
  $region34: #{_lambda_.1} parent=0 // pred_check
    _
  $region35: #{_lambda_.1} parent=0 // pred_check_branch
    %34 = sbr.rel (0) target = $region37
  $region36: #{_lambda_.1} parent=0 // pred_region
    _
  $region37: #{_lambda_.1} parent=0 // pred_fallthru
    _
  // Predicated region
  $region38: #{_lambda_.1} parent=0 // pred_check
    _
  $region39: #{_lambda_.1} parent=0 // pred_check_branch
    %36 = sbr.rel (0) target = $region41
  $region40: #{_lambda_.1} parent=0 // pred_region
    _
  $region41: #{_lambda_.1} parent=0 // pred_fallthru
    _
  // Predicated region
  $region42: #{_lambda_.1} parent=0 // pred_check
    _
  $region43: #{_lambda_.1} parent=0 // pred_check_branch
    %38 = sbr.rel (0) target = $region45
  $region44: #{_lambda_.1} parent=0 // pred_region
    _
  $region45: #{_lambda_.1} parent=0 // pred_fallthru
    _
  // Predicated region
  $region46: #{_lambda_.1} parent=0 // pred_check
    _
  $region47: #{_lambda_.1} parent=0 // pred_check_branch
    %40 = sbr.rel (0) target = $region49
  $region48: #{_lambda_.1} parent=0 // pred_region
    _
  $region49: #{_lambda_.1} parent=0 // pred_fallthru
    _
  %v42 = vld [vmem:[%s0] sm:$0x1f]
  %v43 = vld [vmem:[%s0 + $0x8] sm:$0x1f]
  %v44 = vld [vmem:[%s4] sm:$0xff]
  %v45 = vld [vmem:[%s4 + $0x8] sm:$0xff]
  %v46 = vld [vmem:[%s4 + $0x10] sm:$0xff]
  %v47 = vld [vmem:[%s4 + $0x18] sm:$0xff]
  %v48 = vld [vmem:[%s4 + $0x20] sm:$0xff]
  %v49 = vld [vmem:[%s4 + $0x28] sm:$0xff]
  %v50 = vld [vmem:[%s4 + $0x30] sm:$0xff]
  %v51 = vld [vmem:[%s4 + $0x38] sm:$0xff]
  %v52 = vld [vmem:[%s3] sm:$0xff]
  %v53 = vld [vmem:[%s3 + $0x8] sm:$0xff]
  %v54 = vld [vmem:[%s3 + $0x10] sm:$0xff]
  %v55 = vld [vmem:[%s3 + $0x18] sm:$0xff]
  %v56 = vld [vmem:[%s3 + $0x20] sm:$0xff]
  %v57 = vld [vmem:[%s3 + $0x28] sm:$0xff]
  %v58 = vld [vmem:[%s3 + $0x30] sm:$0xff]
  %v59 = vld [vmem:[%s3 + $0x38] sm:$0xff]
  %61 = vset.pattern.permute.xlu0 0
  %62 = vperm.xlu0 %61, %v52
  %v63 = vpop.permute.xlu0 %62
  %66 = vset.pattern.permute.xlu0 0
  %67 = vperm.xlu0 %66, %v53
  %v68 = vpop.permute.xlu0 %67
  %71 = vset.pattern.permute.xlu0 0
  %72 = vperm.xlu0 %71, %v54
  %v73 = vpop.permute.xlu0 %72
  %76 = vset.pattern.permute.xlu0 0
  %77 = vperm.xlu0 %76, %v55
  %v78 = vpop.permute.xlu0 %77
  %81 = vset.pattern.permute.xlu0 0
  %82 = vperm.xlu0 %81, %v56
  %v83 = vpop.permute.xlu0 %82
  %86 = vset.pattern.permute.xlu0 0
  %87 = vperm.xlu0 %86, %v57
  %v88 = vpop.permute.xlu0 %87
  %91 = vset.pattern.permute.xlu0 0
  %92 = vperm.xlu0 %91, %v58
  %v93 = vpop.permute.xlu0 %92
  %96 = vset.pattern.permute.xlu0 0
  %97 = vperm.xlu0 %96, %v59
  %v98 = vpop.permute.xlu0 %97
  %v100 = vperm.slane %v42, 0
  %v101 = vperm.slane %v43, 0
  %v102 = vmul.f32 %v63, %v100
  %v103 = vmul.f32 %v63, %v101
  %v104 = vmul.f32 %v68, %v100
  %v105 = vmul.f32 %v68, %v101
  %v106 = vmul.f32 %v73, %v100
  %v107 = vmul.f32 %v73, %v101
  %v108 = vmul.f32 %v78, %v100
  %v109 = vmul.f32 %v78, %v101
  %v110 = vmul.f32 %v83, %v100
  %v111 = vmul.f32 %v83, %v101
  %v112 = vmul.f32 %v88, %v100
  %v113 = vmul.f32 %v88, %v101
  %v114 = vmul.f32 %v93, %v100
  %v115 = vmul.f32 %v93, %v101
  %v116 = vmul.f32 %v98, %v100
  %v117 = vmul.f32 %v98, %v101
  %119 = vset.pattern.permute.xlu0 0
  %120 = vperm.xlu0 %119, %v44
  %v121 = vpop.permute.xlu0 %120
  %124 = vset.pattern.permute.xlu0 0
  %125 = vperm.xlu0 %124, %v45
  %v126 = vpop.permute.xlu0 %125
  %129 = vset.pattern.permute.xlu0 0
  %130 = vperm.xlu0 %129, %v46
  %v131 = vpop.permute.xlu0 %130
  %134 = vset.pattern.permute.xlu0 0
  %135 = vperm.xlu0 %134, %v47
  %v136 = vpop.permute.xlu0 %135
  %139 = vset.pattern.permute.xlu0 0
  %140 = vperm.xlu0 %139, %v48
  %v141 = vpop.permute.xlu0 %140
  %144 = vset.pattern.permute.xlu0 0
  %145 = vperm.xlu0 %144, %v49
  %v146 = vpop.permute.xlu0 %145
  %149 = vset.pattern.permute.xlu0 0
  %150 = vperm.xlu0 %149, %v50
  %v151 = vpop.permute.xlu0 %150
  %154 = vset.pattern.permute.xlu0 0
  %155 = vperm.xlu0 %154, %v51
  %v156 = vpop.permute.xlu0 %155
  %v158 = vadd.f32 %v121, %v102
  %v159 = vadd.f32 %v121, %v103
  %v160 = vadd.f32 %v126, %v104
  %v161 = vadd.f32 %v126, %v105
  %v162 = vadd.f32 %v131, %v106
  %v163 = vadd.f32 %v131, %v107
  %v164 = vadd.f32 %v136, %v108
  %v165 = vadd.f32 %v136, %v109
  %v166 = vadd.f32 %v141, %v110
  %v167 = vadd.f32 %v141, %v111
  %v168 = vadd.f32 %v146, %v112
  %v169 = vadd.f32 %v146, %v113
  %v170 = vadd.f32 %v151, %v114
  %v171 = vadd.f32 %v151, %v115
  %v172 = vadd.f32 %v156, %v116
  %v173 = vadd.f32 %v156, %v117
  %174 = vset.pattern.permute.xlu0 1
  %175 = vperm.xlu0 %174, %v52
  %v176 = vpop.permute.xlu0 %175
  %178 = vset.pattern.permute.xlu0 1
  %179 = vperm.xlu0 %178, %v53
  %v180 = vpop.permute.xlu0 %179
  %182 = vset.pattern.permute.xlu0 1
  %183 = vperm.xlu0 %182, %v54
  %v184 = vpop.permute.xlu0 %183
  %186 = vset.pattern.permute.xlu0 1
  %187 = vperm.xlu0 %186, %v55
  %v188 = vpop.permute.xlu0 %187
  %190 = vset.pattern.permute.xlu0 1
  %191 = vperm.xlu0 %190, %v56
  %v192 = vpop.permute.xlu0 %191
  %194 = vset.pattern.permute.xlu0 1
  %195 = vperm.xlu0 %194, %v57
  %v196 = vpop.permute.xlu0 %195
  %198 = vset.pattern.permute.xlu0 1
  %199 = vperm.xlu0 %198, %v58
  %v200 = vpop.permute.xlu0 %199
  %202 = vset.pattern.permute.xlu0 1
  %203 = vperm.xlu0 %202, %v59
  %v204 = vpop.permute.xlu0 %203
  %v206 = vperm.slane %v42, 1
  %v207 = vperm.slane %v43, 1
  %v208 = vmul.f32 %v176, %v206
  %v209 = vmul.f32 %v176, %v207
  %v210 = vmul.f32 %v180, %v206
  %v211 = vmul.f32 %v180, %v207
  %v212 = vmul.f32 %v184, %v206
  %v213 = vmul.f32 %v184, %v207
  %v214 = vmul.f32 %v188, %v206
  %v215 = vmul.f32 %v188, %v207
  %v216 = vmul.f32 %v192, %v206
  %v217 = vmul.f32 %v192, %v207
  %v218 = vmul.f32 %v196, %v206
  %v219 = vmul.f32 %v196, %v207
  %v220 = vmul.f32 %v200, %v206
  %v221 = vmul.f32 %v200, %v207
  %v222 = vmul.f32 %v204, %v206
  %v223 = vmul.f32 %v204, %v207
  %v224 = vadd.f32 %v158, %v208
  %v225 = vadd.f32 %v159, %v209
  %v226 = vadd.f32 %v160, %v210
  %v227 = vadd.f32 %v161, %v211
  %v228 = vadd.f32 %v162, %v212
  %v229 = vadd.f32 %v163, %v213
  %v230 = vadd.f32 %v164, %v214
  %v231 = vadd.f32 %v165, %v215
  %v232 = vadd.f32 %v166, %v216
  %v233 = vadd.f32 %v167, %v217
  %v234 = vadd.f32 %v168, %v218
  %v235 = vadd.f32 %v169, %v219
  %v236 = vadd.f32 %v170, %v220
  %v237 = vadd.f32 %v171, %v221
  %v238 = vadd.f32 %v172, %v222
  %v239 = vadd.f32 %v173, %v223
  %240 = vset.pattern.permute.xlu0 2
  %241 = vperm.xlu0 %240, %v52
  %v242 = vpop.permute.xlu0 %241
  %244 = vset.pattern.permute.xlu0 2
  %245 = vperm.xlu0 %244, %v53
  %v246 = vpop.permute.xlu0 %245
  %248 = vset.pattern.permute.xlu0 2
  %249 = vperm.xlu0 %248, %v54
  %v250 = vpop.permute.xlu0 %249
  %252 = vset.pattern.permute.xlu0 2
  %253 = vperm.xlu0 %252, %v55
  %v254 = vpop.permute.xlu0 %253
  %256 = vset.pattern.permute.xlu0 2
  %257 = vperm.xlu0 %256, %v56
  %v258 = vpop.permute.xlu0 %257
  %260 = vset.pattern.permute.xlu0 2
  %261 = vperm.xlu0 %260, %v57
  %v262 = vpop.permute.xlu0 %261
  %264 = vset.pattern.permute.xlu0 2
  %265 = vperm.xlu0 %264, %v58
  %v266 = vpop.permute.xlu0 %265
  %268 = vset.pattern.permute.xlu0 2
  %269 = vperm.xlu0 %268, %v59
  %v270 = vpop.permute.xlu0 %269
  %v272 = vperm.slane %v42, 2
  %v273 = vperm.slane %v43, 2
  %v274 = vmul.f32 %v242, %v272
  %v275 = vmul.f32 %v242, %v273
  %v276 = vmul.f32 %v246, %v272
  %v277 = vmul.f32 %v246, %v273
  %v278 = vmul.f32 %v250, %v272
  %v279 = vmul.f32 %v250, %v273
  %v280 = vmul.f32 %v254, %v272
  %v281 = vmul.f32 %v254, %v273
  %v282 = vmul.f32 %v258, %v272
  %v283 = vmul.f32 %v258, %v273
  %v284 = vmul.f32 %v262, %v272
  %v285 = vmul.f32 %v262, %v273
  %v286 = vmul.f32 %v266, %v272
  %v287 = vmul.f32 %v266, %v273
  %v288 = vmul.f32 %v270, %v272
  %v289 = vmul.f32 %v270, %v273
  %v290 = vadd.f32 %v224, %v274
  %v291 = vadd.f32 %v225, %v275
  %v292 = vadd.f32 %v226, %v276
  %v293 = vadd.f32 %v227, %v277
  %v294 = vadd.f32 %v228, %v278
  %v295 = vadd.f32 %v229, %v279
  %v296 = vadd.f32 %v230, %v280
  %v297 = vadd.f32 %v231, %v281
  %v298 = vadd.f32 %v232, %v282
  %v299 = vadd.f32 %v233, %v283
  %v300 = vadd.f32 %v234, %v284
  %v301 = vadd.f32 %v235, %v285
  %v302 = vadd.f32 %v236, %v286
  %v303 = vadd.f32 %v237, %v287
  %v304 = vadd.f32 %v238, %v288
  %v305 = vadd.f32 %v239, %v289
  %v306 = vmax.f32 %v290, 0.0
  %v307 = vmax.f32 %v291, 0.0
  %v308 = vmax.f32 %v292, 0.0
  %v309 = vmax.f32 %v293, 0.0
  %v310 = vmax.f32 %v294, 0.0
  %v311 = vmax.f32 %v295, 0.0
  %v312 = vmax.f32 %v296, 0.0
  %v313 = vmax.f32 %v297, 0.0
  %v314 = vmax.f32 %v298, 0.0
  %v315 = vmax.f32 %v299, 0.0
  %v316 = vmax.f32 %v300, 0.0
  %v317 = vmax.f32 %v301, 0.0
  %v318 = vmax.f32 %v302, 0.0
  %v319 = vmax.f32 %v303, 0.0
  %v320 = vmax.f32 %v304, 0.0
  %v321 = vmax.f32 %v305, 0.0
  %v322 = vld [vmem:[%s5] sm:$0xff]
  %v323 = vld [vmem:[%s5 + $0x8] sm:$0xff]
  %v324 = vld [vmem:[%s5 + $0x10] sm:$0xff]
  %v325 = vld [vmem:[%s5 + $0x18] sm:$0xff]
  %v326 = vld [vmem:[%s5 + $0x20] sm:$0xff]
  %v327 = vld [vmem:[%s5 + $0x28] sm:$0xff]
  %v328 = vld [vmem:[%s5 + $0x30] sm:$0xff]
  %v329 = vld [vmem:[%s5 + $0x38] sm:$0xff]
  %v330 = vld [vmem:[%s6] sm:$0xff]
  %v331 = vld [vmem:[%s6 + $0x8] sm:$0xff]
  %v332 = vld [vmem:[%s6 + $0x10] sm:$0xff]
  %v333 = vld [vmem:[%s6 + $0x18] sm:$0xff]
  %v334 = vld [vmem:[%s6 + $0x20] sm:$0xff]
  %v335 = vld [vmem:[%s6 + $0x28] sm:$0xff]
  %v336 = vld [vmem:[%s6 + $0x30] sm:$0xff]
  %v337 = vld [vmem:[%s6 + $0x38] sm:$0xff]
  %339 = vset.pattern.permute.xlu0 0
  %340 = vperm.xlu0 %339, %v330
  %v341 = vpop.permute.xlu0 %340
  %344 = vset.pattern.permute.xlu0 0
  %345 = vperm.xlu0 %344, %v331
  %v346 = vpop.permute.xlu0 %345
  %349 = vset.pattern.permute.xlu0 0
  %350 = vperm.xlu0 %349, %v332
  %v351 = vpop.permute.xlu0 %350
  %354 = vset.pattern.permute.xlu0 0
  %355 = vperm.xlu0 %354, %v333
  %v356 = vpop.permute.xlu0 %355
  %359 = vset.pattern.permute.xlu0 0
  %360 = vperm.xlu0 %359, %v334
  %v361 = vpop.permute.xlu0 %360
  %364 = vset.pattern.permute.xlu0 0
  %365 = vperm.xlu0 %364, %v335
  %v366 = vpop.permute.xlu0 %365
  %369 = vset.pattern.permute.xlu0 0
  %370 = vperm.xlu0 %369, %v336
  %v371 = vpop.permute.xlu0 %370
  %374 = vset.pattern.permute.xlu0 0
  %375 = vperm.xlu0 %374, %v337
  %v376 = vpop.permute.xlu0 %375
  %vm378 = vcmask 523264
  %v380 = vsel %vm378, %v322, 0
  %v383 = vsel %vm378, %v323, 0
  %v386 = vsel %vm378, %v324, 0
  %v389 = vsel %vm378, %v325, 0
  %v392 = vsel %vm378, %v326, 0
  %v395 = vsel %vm378, %v327, 0
  %v398 = vsel %vm378, %v328, 0
  %v401 = vsel %vm378, %v329, 0
  %403 = vmatpush.msra.mxu0 0.0
  %404 = vmatpush.msra.mxu0 0.0
  %405 = vmatpush.msra.mxu0 0.0
  %406 = vmatpush.msra.mxu0 0.0
  %407 = vmatpush.msra.mxu0 0.0
  %408 = vmatpush.msra.mxu0 0.0
  %409 = vmatpush.msra.mxu0 0.0
  %410 = vmatpush.msra.mxu0 0.0
  %411 = vmatpush.msra.mxu0 %v320
  %412 = vmatpush.msra.mxu0 %v318
  %413 = vmatpush.msra.mxu0 %v316
  %414 = vmatpush.msra.mxu0 %v314
  %415 = vmatpush.msra.mxu0 %v312
  %416 = vmatpush.msra.mxu0 %v310
  %417 = vmatpush.msra.mxu0 %v308
  %418 = vmatpush.msra.mxu0 %v306
  %419 = vmatmul.f32.gmra.mxu0 %v380
  %v420 = vpop.f32.mrf.mxu0
  %v421 = vadd.f32 %v341, %v420
  %422 = vmatmul.f32.gmra.mxu0 %v383
  %v423 = vpop.f32.mrf.mxu0
  %v424 = vadd.f32 %v346, %v423
  %425 = vmatmul.f32.gmra.mxu0 %v386
  %v426 = vpop.f32.mrf.mxu0
  %v427 = vadd.f32 %v351, %v426
  %428 = vmatmul.f32.gmra.mxu0 %v389
  %v429 = vpop.f32.mrf.mxu0
  %v430 = vadd.f32 %v356, %v429
  %431 = vmatmul.f32.gmra.mxu0 %v392
  %v432 = vpop.f32.mrf.mxu0
  %v433 = vadd.f32 %v361, %v432
  %434 = vmatmul.f32.gmra.mxu0 %v395
  %v435 = vpop.f32.mrf.mxu0
  %v436 = vadd.f32 %v366, %v435
  %437 = vmatmul.f32.gmra.mxu0 %v398
  %v438 = vpop.f32.mrf.mxu0
  %v439 = vadd.f32 %v371, %v438
  %440 = vmatmul.f32.gmra.mxu0 %v401
  %v441 = vpop.f32.mrf.mxu0
  %v442 = vadd.f32 %v376, %v441
  %443 = vdwg.mxu0
  %444 = vmatpush.msra.mxu0 0.0
  %445 = vmatpush.msra.mxu0 0.0
  %446 = vmatpush.msra.mxu0 0.0
  %447 = vmatpush.msra.mxu0 0.0
  %448 = vmatpush.msra.mxu0 0.0
  %449 = vmatpush.msra.mxu0 0.0
  %450 = vmatpush.msra.mxu0 0.0
  %451 = vmatpush.msra.mxu0 0.0
  %452 = vmatpush.msra.mxu0 %v321
  %453 = vmatpush.msra.mxu0 %v319
  %454 = vmatpush.msra.mxu0 %v317
  %455 = vmatpush.msra.mxu0 %v315
  %456 = vmatpush.msra.mxu0 %v313
  %457 = vmatpush.msra.mxu0 %v311
  %458 = vmatpush.msra.mxu0 %v309
  %459 = vmatpush.msra.mxu0 %v307
  %460 = vmatmul.f32.gmra.mxu0 %v380
  %v461 = vpop.f32.mrf.mxu0
  %v462 = vadd.f32 %v341, %v461
  %463 = vmatmul.f32.gmra.mxu0 %v383
  %v464 = vpop.f32.mrf.mxu0
  %v465 = vadd.f32 %v346, %v464
  %466 = vmatmul.f32.gmra.mxu0 %v386
  %v467 = vpop.f32.mrf.mxu0
  %v468 = vadd.f32 %v351, %v467
  %469 = vmatmul.f32.gmra.mxu0 %v389
  %v470 = vpop.f32.mrf.mxu0
  %v471 = vadd.f32 %v356, %v470
  %472 = vmatmul.f32.gmra.mxu0 %v392
  %v473 = vpop.f32.mrf.mxu0
  %v474 = vadd.f32 %v361, %v473
  %475 = vmatmul.f32.gmra.mxu0 %v395
  %v476 = vpop.f32.mrf.mxu0
  %v477 = vadd.f32 %v366, %v476
  %478 = vmatmul.f32.gmra.mxu0 %v398
  %v479 = vpop.f32.mrf.mxu0
  %v480 = vadd.f32 %v371, %v479
  %481 = vmatmul.f32.gmra.mxu0 %v401
  %v482 = vpop.f32.mrf.mxu0
  %v483 = vadd.f32 %v376, %v482
  %484 = vdwg.mxu0
  %v485 = vmax.f32 %v421, 0.0
  %v486 = vmax.f32 %v462, 0.0
  %v487 = vmax.f32 %v424, 0.0
  %v488 = vmax.f32 %v465, 0.0
  %v489 = vmax.f32 %v427, 0.0
  %v490 = vmax.f32 %v468, 0.0
  %v491 = vmax.f32 %v430, 0.0
  %v492 = vmax.f32 %v471, 0.0
  %v493 = vmax.f32 %v433, 0.0
  %v494 = vmax.f32 %v474, 0.0
  %v495 = vmax.f32 %v436, 0.0
  %v496 = vmax.f32 %v477, 0.0
  %v497 = vmax.f32 %v439, 0.0
  %v498 = vmax.f32 %v480, 0.0
  %v499 = vmax.f32 %v442, 0.0
  %v500 = vmax.f32 %v483, 0.0
  %v501 = vld [vmem:[%s7] sm:$0xff]
  %v502 = vld [vmem:[%s8] sm:$0xff]
  %504 = vset.pattern.permute.xlu0 0
  %505 = vperm.xlu0 %504, %v502
  %v506 = vpop.permute.xlu0 %505
  %v509 = vsel %vm378, %v501, 0
  %511 = vmatpush.msra.mxu0 0.0
  %512 = vmatpush.msra.mxu0 0.0
  %513 = vmatpush.msra.mxu0 0.0
  %514 = vmatpush.msra.mxu0 0.0
  %515 = vmatpush.msra.mxu0 0.0
  %516 = vmatpush.msra.mxu0 0.0
  %517 = vmatpush.msra.mxu0 0.0
  %518 = vmatpush.msra.mxu0 0.0
  %519 = vmatpush.msra.mxu0 %v499
  %520 = vmatpush.msra.mxu0 %v497
  %521 = vmatpush.msra.mxu0 %v495
  %522 = vmatpush.msra.mxu0 %v493
  %523 = vmatpush.msra.mxu0 %v491
  %524 = vmatpush.msra.mxu0 %v489
  %525 = vmatpush.msra.mxu0 %v487
  %526 = vmatpush.msra.mxu0 %v485
  %527 = vmatmul.f32.gmra.mxu0 %v509
  %v528 = vpop.f32.mrf.mxu0
  %v529 = vadd.f32 %v506, %v528
  %530 = vdwg.mxu0
  %531 = vmatpush.msra.mxu0 0.0
  %532 = vmatpush.msra.mxu0 0.0
  %533 = vmatpush.msra.mxu0 0.0
  %534 = vmatpush.msra.mxu0 0.0
  %535 = vmatpush.msra.mxu0 0.0
  %536 = vmatpush.msra.mxu0 0.0
  %537 = vmatpush.msra.mxu0 0.0
  %538 = vmatpush.msra.mxu0 0.0
  %539 = vmatpush.msra.mxu0 %v500
  %540 = vmatpush.msra.mxu0 %v498
  %541 = vmatpush.msra.mxu0 %v496
  %542 = vmatpush.msra.mxu0 %v494
  %543 = vmatpush.msra.mxu0 %v492
  %544 = vmatpush.msra.mxu0 %v490
  %545 = vmatpush.msra.mxu0 %v488
  %546 = vmatpush.msra.mxu0 %v486
  %547 = vmatmul.f32.gmra.mxu0 %v509
  %v548 = vpop.f32.mrf.mxu0
  %v549 = vadd.f32 %v506, %v548
  %550 = vdwg.mxu0
  %v551 = vsub.f32 0.0, %v529
  %v552 = vsub.f32 0.0, %v549
  %v553 = vmul.f32 %v551, 1.442695
  %v554 = vpow.pop %v553
  %v555 = vmul.f32 %v552, 1.442695
  %v556 = vpow.pop %v555
  %v557 = vadd.f32 %v554, 1.0
  %v558 = vadd.f32 %v556, 1.0
  %v559 = vrcp.pop %v557
  %v560 = vrcp.pop %v558
  %v563 = vrot.slane %v529, 1
  %v564 = vrot.slane %v549, 1
  %v567 = vadd.f32 %v42, %v563
  %v568 = vadd.f32 %v43, %v564
  %v569 = vld [vmem:[%s1] sm:$0xff]
  %v570 = vld [vmem:[%s1 + $0x8] sm:$0xff]
  %v571 = vld [vmem:[%s1 + $0x10] sm:$0xff]
  %v572 = vld [vmem:[%s1 + $0x18] sm:$0xff]
  %v573 = vld [vmem:[%s1 + $0x20] sm:$0xff]
  %v574 = vld [vmem:[%s1 + $0x28] sm:$0xff]
  %v575 = vld [vmem:[%s1 + $0x30] sm:$0xff]
  %v576 = vld [vmem:[%s1 + $0x38] sm:$0xff]
  %v577 = vld [vmem:[%s2] sm:$0xff]
  %v578 = vld [vmem:[%s2 + $0x8] sm:$0xff]
  %v579 = vld [vmem:[%s2 + $0x10] sm:$0xff]
  %v580 = vld [vmem:[%s2 + $0x18] sm:$0xff]
  %v581 = vld [vmem:[%s2 + $0x20] sm:$0xff]
  %v582 = vld [vmem:[%s2 + $0x28] sm:$0xff]
  %v583 = vld [vmem:[%s2 + $0x30] sm:$0xff]
  %v584 = vld [vmem:[%s2 + $0x38] sm:$0xff]
  %586 = vset.pattern.permute.xlu0 0
  %587 = vperm.xlu0 %586, %v569
  %v588 = vpop.permute.xlu0 %587
  %591 = vset.pattern.permute.xlu0 0
  %592 = vperm.xlu0 %591, %v570
  %v593 = vpop.permute.xlu0 %592
  %596 = vset.pattern.permute.xlu0 0
  %597 = vperm.xlu0 %596, %v571
  %v598 = vpop.permute.xlu0 %597
  %601 = vset.pattern.permute.xlu0 0
  %602 = vperm.xlu0 %601, %v572
  %v603 = vpop.permute.xlu0 %602
  %606 = vset.pattern.permute.xlu0 0
  %607 = vperm.xlu0 %606, %v573
  %v608 = vpop.permute.xlu0 %607
  %611 = vset.pattern.permute.xlu0 0
  %612 = vperm.xlu0 %611, %v574
  %v613 = vpop.permute.xlu0 %612
  %616 = vset.pattern.permute.xlu0 0
  %617 = vperm.xlu0 %616, %v575
  %v618 = vpop.permute.xlu0 %617
  %621 = vset.pattern.permute.xlu0 0
  %622 = vperm.xlu0 %621, %v576
  %v623 = vpop.permute.xlu0 %622
  %v625 = vperm.slane %v567, 3
  %v626 = vperm.slane %v568, 3
  %v627 = vsub.f32 %v588, %v625
  %v628 = vsub.f32 %v588, %v626
  %v629 = vsub.f32 %v593, %v625
  %v630 = vsub.f32 %v593, %v626
  %v631 = vsub.f32 %v598, %v625
  %v632 = vsub.f32 %v598, %v626
  %v633 = vsub.f32 %v603, %v625
  %v634 = vsub.f32 %v603, %v626
  %v635 = vsub.f32 %v608, %v625
  %v636 = vsub.f32 %v608, %v626
  %v637 = vsub.f32 %v613, %v625
  %v638 = vsub.f32 %v613, %v626
  %v639 = vsub.f32 %v618, %v625
  %v640 = vsub.f32 %v618, %v626
  %v641 = vsub.f32 %v623, %v625
  %v642 = vsub.f32 %v623, %v626
  %v643 = vand.u32 2147483647, %v627
  %v644 = vand.u32 2147483647, %v628
  %v645 = vand.u32 2147483647, %v629
  %v646 = vand.u32 2147483647, %v630
  %v647 = vand.u32 2147483647, %v631
  %v648 = vand.u32 2147483647, %v632
  %v649 = vand.u32 2147483647, %v633
  %v650 = vand.u32 2147483647, %v634
  %v651 = vand.u32 2147483647, %v635
  %v652 = vand.u32 2147483647, %v636
  %v653 = vand.u32 2147483647, %v637
  %v654 = vand.u32 2147483647, %v638
  %v655 = vand.u32 2147483647, %v639
  %v656 = vand.u32 2147483647, %v640
  %v657 = vand.u32 2147483647, %v641
  %v658 = vand.u32 2147483647, %v642
  %v659 = vsub.f32 1.0, %v643
  %v660 = vsub.f32 1.0, %v644
  %v661 = vsub.f32 1.0, %v645
  %v662 = vsub.f32 1.0, %v646
  %v663 = vsub.f32 1.0, %v647
  %v664 = vsub.f32 1.0, %v648
  %v665 = vsub.f32 1.0, %v649
  %v666 = vsub.f32 1.0, %v650
  %v667 = vsub.f32 1.0, %v651
  %v668 = vsub.f32 1.0, %v652
  %v669 = vsub.f32 1.0, %v653
  %v670 = vsub.f32 1.0, %v654
  %v671 = vsub.f32 1.0, %v655
  %v672 = vsub.f32 1.0, %v656
  %v673 = vsub.f32 1.0, %v657
  %v674 = vsub.f32 1.0, %v658
  %v675 = vmax.f32 %v659, 0.0
  %v676 = vmax.f32 %v660, 0.0
  %v677 = vmax.f32 %v661, 0.0
  %v678 = vmax.f32 %v662, 0.0
  %v679 = vmax.f32 %v663, 0.0
  %v680 = vmax.f32 %v664, 0.0
  %v681 = vmax.f32 %v665, 0.0
  %v682 = vmax.f32 %v666, 0.0
  %v683 = vmax.f32 %v667, 0.0
  %v684 = vmax.f32 %v668, 0.0
  %v685 = vmax.f32 %v669, 0.0
  %v686 = vmax.f32 %v670, 0.0
  %v687 = vmax.f32 %v671, 0.0
  %v688 = vmax.f32 %v672, 0.0
  %v689 = vmax.f32 %v673, 0.0
  %v690 = vmax.f32 %v674, 0.0
  %692 = vset.pattern.permute.xlu0 0
  %693 = vperm.xlu0 %692, %v577
  %v694 = vpop.permute.xlu0 %693
  %697 = vset.pattern.permute.xlu0 0
  %698 = vperm.xlu0 %697, %v578
  %v699 = vpop.permute.xlu0 %698
  %702 = vset.pattern.permute.xlu0 0
  %703 = vperm.xlu0 %702, %v579
  %v704 = vpop.permute.xlu0 %703
  %707 = vset.pattern.permute.xlu0 0
  %708 = vperm.xlu0 %707, %v580
  %v709 = vpop.permute.xlu0 %708
  %712 = vset.pattern.permute.xlu0 0
  %713 = vperm.xlu0 %712, %v581
  %v714 = vpop.permute.xlu0 %713
  %717 = vset.pattern.permute.xlu0 0
  %718 = vperm.xlu0 %717, %v582
  %v719 = vpop.permute.xlu0 %718
  %722 = vset.pattern.permute.xlu0 0
  %723 = vperm.xlu0 %722, %v583
  %v724 = vpop.permute.xlu0 %723
  %727 = vset.pattern.permute.xlu0 0
  %728 = vperm.xlu0 %727, %v584
  %v729 = vpop.permute.xlu0 %728
  %v731 = vperm.slane %v567, 4
  %v732 = vperm.slane %v568, 4
  %v733 = vsub.f32 %v694, %v731
  %v734 = vsub.f32 %v694, %v732
  %v735 = vsub.f32 %v699, %v731
  %v736 = vsub.f32 %v699, %v732
  %v737 = vsub.f32 %v704, %v731
  %v738 = vsub.f32 %v704, %v732
  %v739 = vsub.f32 %v709, %v731
  %v740 = vsub.f32 %v709, %v732
  %v741 = vsub.f32 %v714, %v731
  %v742 = vsub.f32 %v714, %v732
  %v743 = vsub.f32 %v719, %v731
  %v744 = vsub.f32 %v719, %v732
  %v745 = vsub.f32 %v724, %v731
  %v746 = vsub.f32 %v724, %v732
  %v747 = vsub.f32 %v729, %v731
  %v748 = vsub.f32 %v729, %v732
  %v749 = vand.u32 2147483647, %v733
  %v750 = vand.u32 2147483647, %v734
  %v751 = vand.u32 2147483647, %v735
  %v752 = vand.u32 2147483647, %v736
  %v753 = vand.u32 2147483647, %v737
  %v754 = vand.u32 2147483647, %v738
  %v755 = vand.u32 2147483647, %v739
  %v756 = vand.u32 2147483647, %v740
  %v757 = vand.u32 2147483647, %v741
  %v758 = vand.u32 2147483647, %v742
  %v759 = vand.u32 2147483647, %v743
  %v760 = vand.u32 2147483647, %v744
  %v761 = vand.u32 2147483647, %v745
  %v762 = vand.u32 2147483647, %v746
  %v763 = vand.u32 2147483647, %v747
  %v764 = vand.u32 2147483647, %v748
  %v765 = vsub.f32 1.0, %v749
  %v766 = vsub.f32 1.0, %v750
  %v767 = vsub.f32 1.0, %v751
  %v768 = vsub.f32 1.0, %v752
  %v769 = vsub.f32 1.0, %v753
  %v770 = vsub.f32 1.0, %v754
  %v771 = vsub.f32 1.0, %v755
  %v772 = vsub.f32 1.0, %v756
  %v773 = vsub.f32 1.0, %v757
  %v774 = vsub.f32 1.0, %v758
  %v775 = vsub.f32 1.0, %v759
  %v776 = vsub.f32 1.0, %v760
  %v777 = vsub.f32 1.0, %v761
  %v778 = vsub.f32 1.0, %v762
  %v779 = vsub.f32 1.0, %v763
  %v780 = vsub.f32 1.0, %v764
  %v781 = vmax.f32 %v765, 0.0
  %v782 = vmax.f32 %v766, 0.0
  %v783 = vmax.f32 %v767, 0.0
  %v784 = vmax.f32 %v768, 0.0
  %v785 = vmax.f32 %v769, 0.0
  %v786 = vmax.f32 %v770, 0.0
  %v787 = vmax.f32 %v771, 0.0
  %v788 = vmax.f32 %v772, 0.0
  %v789 = vmax.f32 %v773, 0.0
  %v790 = vmax.f32 %v774, 0.0
  %v791 = vmax.f32 %v775, 0.0
  %v792 = vmax.f32 %v776, 0.0
  %v793 = vmax.f32 %v777, 0.0
  %v794 = vmax.f32 %v778, 0.0
  %v795 = vmax.f32 %v779, 0.0
  %v796 = vmax.f32 %v780, 0.0
  %v797 = vmul.f32 %v675, %v781
  %v798 = vmul.f32 %v676, %v782
  %v799 = vmul.f32 %v677, %v783
  %v800 = vmul.f32 %v678, %v784
  %v801 = vmul.f32 %v679, %v785
  %v802 = vmul.f32 %v680, %v786
  %v803 = vmul.f32 %v681, %v787
  %v804 = vmul.f32 %v682, %v788
  %v805 = vmul.f32 %v683, %v789
  %v806 = vmul.f32 %v684, %v790
  %v807 = vmul.f32 %v685, %v791
  %v808 = vmul.f32 %v686, %v792
  %v809 = vmul.f32 %v687, %v793
  %v810 = vmul.f32 %v688, %v794
  %v811 = vmul.f32 %v689, %v795
  %v812 = vmul.f32 %v690, %v796
  %v813 = vpack.c.bf16 %v799, %v797
  %v814 = vpack.c.bf16 %v800, %v798
  %v815 = vpack.c.bf16 %v803, %v801
  %v816 = vpack.c.bf16 %v804, %v802
  %v817 = vpack.c.bf16 %v807, %v805
  %v818 = vpack.c.bf16 %v808, %v806
  %v819 = vpack.c.bf16 %v811, %v809
  %v820 = vpack.c.bf16 %v812, %v810
  %v821 = vld [vmem:[%s9] sm:$0xf]
  %v822 = vld [vmem:[%s9 + $0x4] sm:$0xf]
  %v823 = vld [vmem:[%s9 + $0x8] sm:$0xf]
  %v824 = vld [vmem:[%s9 + $0xc] sm:$0xf]
  %v829 = vunpack.c.l.b16 %v821
  %v830 = vunpack.c.l.b16 %v822
  %v831 = vunpack.c.l.b16 %v823
  %v832 = vunpack.c.l.b16 %v824
  %v833 = vpack.c.b16 %v830, %v829
  %v834 = vpack.c.b16 %v832, %v831
  %v836 = vsel %vm378, %v833, 0
  %v839 = vsel %vm378, %v834, 0
  %841 = vmatpush.bf16.msra.mxu0 0
  %842 = vmatpush.bf16.msra.mxu0 0
  %843 = vmatpush.bf16.msra.mxu0 0
  %844 = vmatpush.bf16.msra.mxu0 0
  %845 = vmatpush.bf16.msra.mxu0 %v819
  %846 = vmatpush.bf16.msra.mxu0 %v817
  %847 = vmatpush.bf16.msra.mxu0 %v815
  %848 = vmatpush.bf16.msra.mxu0 %v813
  %849 = vmatmul.bf16.gmra.mxu0 %v836
  %v850 = vpop.f32.mrf.mxu0
  %v851 = vadd.f32 0.0, %v850
  %v852 = vpop.f32.mrf.mxu0
  %v853 = vadd.f32 0.0, %v852
  %854 = vmatmul.bf16.gmra.mxu0 %v839
  %v855 = vpop.f32.mrf.mxu0
  %v856 = vadd.f32 0.0, %v855
  %v857 = vpop.f32.mrf.mxu0
  %v858 = vadd.f32 0.0, %v857
  %859 = vdwg.mxu0
  %860 = vmatpush.bf16.msra.mxu0 0
  %861 = vmatpush.bf16.msra.mxu0 0
  %862 = vmatpush.bf16.msra.mxu0 0
  %863 = vmatpush.bf16.msra.mxu0 0
  %864 = vmatpush.bf16.msra.mxu0 %v820
  %865 = vmatpush.bf16.msra.mxu0 %v818
  %866 = vmatpush.bf16.msra.mxu0 %v816
  %867 = vmatpush.bf16.msra.mxu0 %v814
  %868 = vmatmul.bf16.gmra.mxu0 %v836
  %v869 = vpop.f32.mrf.mxu0
  %v870 = vadd.f32 0.0, %v869
  %v871 = vpop.f32.mrf.mxu0
  %v872 = vadd.f32 0.0, %v871
  %873 = vmatmul.bf16.gmra.mxu0 %v839
  %v874 = vpop.f32.mrf.mxu0
  %v875 = vadd.f32 0.0, %v874
  %v876 = vpop.f32.mrf.mxu0
  %v877 = vadd.f32 0.0, %v876
  %878 = vdwg.mxu0
  %v879 = vld [vmem:[%s10] sm:$0xff]
  %v880 = vld [vmem:[%s11] sm:$0xff]
  %v881 = vld [vmem:[%s11 + $0x8] sm:$0xff]
  %vm882 = vcmask 130048
  %v884 = vsel %vm882, %v879, 0
  %886 = vmatpush.msra.mxu0 0.0
  %887 = vmatpush.msra.mxu0 0.0
  %888 = vmatpush.msra.mxu0 0.0
  %889 = vmatpush.msra.mxu0 0.0
  %890 = vmatpush.msra.mxu0 0.0
  %891 = vmatpush.msra.mxu0 0.0
  %892 = vmatpush.msra.mxu0 0.0
  %893 = vmatpush.msra.mxu0 0.0
  %894 = vmatpush.msra.mxu0 0.0
  %895 = vmatpush.msra.mxu0 0.0
  %896 = vmatpush.msra.mxu0 0.0
  %897 = vmatpush.msra.mxu0 0.0
  %898 = vmatpush.msra.mxu0 0.0
  %899 = vmatpush.msra.mxu0 0.0
  %900 = vmatpush.msra.mxu0 %v853
  %901 = vmatpush.msra.mxu0 %v851
  %902 = vmatmul.f32.gmra.mxu0 %v884
  %v903 = vpop.f32.mrf.mxu0
  %v904 = vadd.f32 0.0, %v903
  %905 = vdwg.mxu0
  %906 = vmatpush.msra.mxu0 0.0
  %907 = vmatpush.msra.mxu0 0.0
  %908 = vmatpush.msra.mxu0 0.0
  %909 = vmatpush.msra.mxu0 0.0
  %910 = vmatpush.msra.mxu0 0.0
  %911 = vmatpush.msra.mxu0 0.0
  %912 = vmatpush.msra.mxu0 0.0
  %913 = vmatpush.msra.mxu0 0.0
  %914 = vmatpush.msra.mxu0 0.0
  %915 = vmatpush.msra.mxu0 0.0
  %916 = vmatpush.msra.mxu0 0.0
  %917 = vmatpush.msra.mxu0 0.0
  %918 = vmatpush.msra.mxu0 0.0
  %919 = vmatpush.msra.mxu0 0.0
  %920 = vmatpush.msra.mxu0 %v872
  %921 = vmatpush.msra.mxu0 %v870
  %922 = vmatmul.f32.gmra.mxu0 %v884
  %v923 = vpop.f32.mrf.mxu0
  %v924 = vadd.f32 0.0, %v923
  %925 = vdwg.mxu0
  %v926 = vperm.slane %v559, 0
  %v927 = vperm.slane %v560, 0
  %v928 = vmul.f32 %v926, %v904
  %v929 = vmul.f32 %v927, %v924
  %v930 = vperm.slane %v559, 1
  %v931 = vperm.slane %v560, 1
  %v932 = vmul.f32 %v930, %v904
  %v933 = vmul.f32 %v931, %v924
  %v936 = vrot.slane %v932, 2
  %v937 = vrot.slane %v933, 2
  %v940 = vadd.f32 %v928, %v936
  %v941 = vadd.f32 %v929, %v937
  %v942 = vperm.slane %v559, 2
  %v943 = vperm.slane %v560, 2
  %v944 = vmul.f32 %v942, %v904
  %v945 = vmul.f32 %v943, %v924
  %v948 = vrot.slane %v944, 4
  %v949 = vrot.slane %v945, 4
  %v952 = vadd.f32 %v940, %v948
  %v953 = vadd.f32 %v941, %v949
  %v954 = vperm.slane %v559, 3
  %v955 = vperm.slane %v560, 3
  %v956 = vmul.f32 %v954, %v904
  %v957 = vmul.f32 %v955, %v924
  %v960 = vrot.slane %v956, 6
  %v961 = vrot.slane %v957, 6
  %v964 = vadd.f32 %v952, %v960
  %v965 = vadd.f32 %v953, %v961
  %v966 = vmul.f32 %v926, %v964
  %v967 = vmul.f32 %v927, %v965
  %968 = vst [vmem:[#allocation2] sm:$0x3] %v966
  %969 = vst [vmem:[#allocation2 + $0x8] sm:$0x3] %v967
  %v970 = vmul.f32 %v930, %v964
  %v971 = vmul.f32 %v931, %v965
  %v974 = vrot.slane %v970, 6
  %v975 = vrot.slane %v971, 6
  %978 = vst [vmem:[#allocation2] sm:$0xc] %v974
  %979 = vst [vmem:[#allocation2 + $0x8] sm:$0xc] %v975
  %v980 = vmul.f32 %v942, %v964
  %v981 = vmul.f32 %v943, %v965
  %v984 = vrot.slane %v980, 4
  %v985 = vrot.slane %v981, 4
  %988 = vst [vmem:[#allocation2] sm:$0x30] %v984
  %989 = vst [vmem:[#allocation2 + $0x8] sm:$0x30] %v985
  %v990 = vmul.f32 %v954, %v964
  %v991 = vmul.f32 %v955, %v965
  %v994 = vrot.slane %v990, 2
  %v995 = vrot.slane %v991, 2
  %998 = vst [vmem:[#allocation2] sm:$0xc0] %v994
  %999 = vst [vmem:[#allocation2 + $0x8] sm:$0xc0] %v995
  %v1000 = vld [vmem:[#allocation2] sm:$0xff]
  %v1001 = vld [vmem:[#allocation2 + $0x8] sm:$0xff]
  %vm1002 = vcmask 64512
  %v1004 = vsel %vm1002, %v880, 0
  %v1007 = vsel %vm1002, %v881, 0
  %1009 = vmatpush.msra.mxu0 0.0
  %1010 = vmatpush.msra.mxu0 0.0
  %1011 = vmatpush.msra.mxu0 0.0
  %1012 = vmatpush.msra.mxu0 0.0
  %1013 = vmatpush.msra.mxu0 0.0
  %1014 = vmatpush.msra.mxu0 0.0
  %1015 = vmatpush.msra.mxu0 0.0
  %1016 = vmatpush.msra.mxu0 0.0
  %1017 = vmatpush.msra.mxu0 0.0
  %1018 = vmatpush.msra.mxu0 0.0
  %1019 = vmatpush.msra.mxu0 0.0
  %1020 = vmatpush.msra.mxu0 0.0
  %1021 = vmatpush.msra.mxu0 0.0
  %1022 = vmatpush.msra.mxu0 0.0
  %1023 = vmatpush.msra.mxu0 0.0
  %1024 = vmatpush.msra.mxu0 %v1000
  %1025 = vmatmul.f32.gmra.mxu0 %v1004
  %v1026 = vpop.f32.mrf.mxu0
  %v1027 = vadd.f32 %v851, %v1026
  %1028 = vmatmul.f32.gmra.mxu0 %v1007
  %v1029 = vpop.f32.mrf.mxu0
  %v1030 = vadd.f32 %v853, %v1029
  %1031 = vdwg.mxu0
  %1032 = vmatpush.msra.mxu0 0.0
  %1033 = vmatpush.msra.mxu0 0.0
  %1034 = vmatpush.msra.mxu0 0.0
  %1035 = vmatpush.msra.mxu0 0.0
  %1036 = vmatpush.msra.mxu0 0.0
  %1037 = vmatpush.msra.mxu0 0.0
  %1038 = vmatpush.msra.mxu0 0.0
  %1039 = vmatpush.msra.mxu0 0.0
  %1040 = vmatpush.msra.mxu0 0.0
  %1041 = vmatpush.msra.mxu0 0.0
  %1042 = vmatpush.msra.mxu0 0.0
  %1043 = vmatpush.msra.mxu0 0.0
  %1044 = vmatpush.msra.mxu0 0.0
  %1045 = vmatpush.msra.mxu0 0.0
  %1046 = vmatpush.msra.mxu0 0.0
  %1047 = vmatpush.msra.mxu0 %v1001
  %1048 = vmatmul.f32.gmra.mxu0 %v1004
  %v1049 = vpop.f32.mrf.mxu0
  %v1050 = vadd.f32 %v870, %v1049
  %1051 = vmatmul.f32.gmra.mxu0 %v1007
  %v1052 = vpop.f32.mrf.mxu0
  %v1053 = vadd.f32 %v872, %v1052
  %1054 = vdwg.mxu0
  %1055 = vst [vmem:[%s12] sm:$0xff] %v1027
  %1056 = vst [vmem:[%s12 + $0x8] sm:$0xff] %v1050
  %1057 = vst [vmem:[%s12 + $0x10] sm:$0xff] %v1030
  %1058 = vst [vmem:[%s12 + $0x18] sm:$0xff] %v1053
  %1059 = vmatpush.msra.mxu0 0.0
  %1060 = vmatpush.msra.mxu0 0.0
  %1061 = vmatpush.msra.mxu0 0.0
  %1062 = vmatpush.msra.mxu0 0.0
  %1063 = vmatpush.msra.mxu0 0.0
  %1064 = vmatpush.msra.mxu0 0.0
  %1065 = vmatpush.msra.mxu0 0.0
  %1066 = vmatpush.msra.mxu0 0.0
  %1067 = vmatpush.msra.mxu0 0.0
  %1068 = vmatpush.msra.mxu0 0.0
  %1069 = vmatpush.msra.mxu0 0.0
  %1070 = vmatpush.msra.mxu0 0.0
  %1071 = vmatpush.msra.mxu0 0.0
  %1072 = vmatpush.msra.mxu0 0.0
  %1073 = vmatpush.msra.mxu0 %v858
  %1074 = vmatpush.msra.mxu0 %v856
  %1075 = vmatmul.f32.gmra.mxu0 %v884
  %v1076 = vpop.f32.mrf.mxu0
  %v1077 = vadd.f32 0.0, %v1076
  %1078 = vdwg.mxu0
  %1079 = vmatpush.msra.mxu0 0.0
  %1080 = vmatpush.msra.mxu0 0.0
  %1081 = vmatpush.msra.mxu0 0.0
  %1082 = vmatpush.msra.mxu0 0.0
  %1083 = vmatpush.msra.mxu0 0.0
  %1084 = vmatpush.msra.mxu0 0.0
  %1085 = vmatpush.msra.mxu0 0.0
  %1086 = vmatpush.msra.mxu0 0.0
  %1087 = vmatpush.msra.mxu0 0.0
  %1088 = vmatpush.msra.mxu0 0.0
  %1089 = vmatpush.msra.mxu0 0.0
  %1090 = vmatpush.msra.mxu0 0.0
  %1091 = vmatpush.msra.mxu0 0.0
  %1092 = vmatpush.msra.mxu0 0.0
  %1093 = vmatpush.msra.mxu0 %v877
  %1094 = vmatpush.msra.mxu0 %v875
  %1095 = vmatmul.f32.gmra.mxu0 %v884
  %v1096 = vpop.f32.mrf.mxu0
  %v1097 = vadd.f32 0.0, %v1096
  %1098 = vdwg.mxu0
  %v1099 = vmul.f32 %v926, %v1077
  %v1100 = vmul.f32 %v927, %v1097
  %v1101 = vmul.f32 %v930, %v1077
  %v1102 = vmul.f32 %v931, %v1097
  %v1105 = vrot.slane %v1101, 2
  %v1106 = vrot.slane %v1102, 2
  %v1109 = vadd.f32 %v1099, %v1105
  %v1110 = vadd.f32 %v1100, %v1106
  %v1111 = vmul.f32 %v942, %v1077
  %v1112 = vmul.f32 %v943, %v1097
  %v1115 = vrot.slane %v1111, 4
  %v1116 = vrot.slane %v1112, 4
  %v1119 = vadd.f32 %v1109, %v1115
  %v1120 = vadd.f32 %v1110, %v1116
  %v1121 = vmul.f32 %v954, %v1077
  %v1122 = vmul.f32 %v955, %v1097
  %v1125 = vrot.slane %v1121, 6
  %v1126 = vrot.slane %v1122, 6
  %v1129 = vadd.f32 %v1119, %v1125
  %v1130 = vadd.f32 %v1120, %v1126
  %v1131 = vmul.f32 %v926, %v1129
  %v1132 = vmul.f32 %v927, %v1130
  %1133 = vst [vmem:[#allocation2] sm:$0x3] %v1131
  %1134 = vst [vmem:[#allocation2 + $0x8] sm:$0x3] %v1132
  %v1135 = vmul.f32 %v930, %v1129
  %v1136 = vmul.f32 %v931, %v1130
  %v1139 = vrot.slane %v1135, 6
  %v1140 = vrot.slane %v1136, 6
  %1143 = vst [vmem:[#allocation2] sm:$0xc] %v1139
  %1144 = vst [vmem:[#allocation2 + $0x8] sm:$0xc] %v1140
  %v1145 = vmul.f32 %v942, %v1129
  %v1146 = vmul.f32 %v943, %v1130
  %v1149 = vrot.slane %v1145, 4
  %v1150 = vrot.slane %v1146, 4
  %1153 = vst [vmem:[#allocation2] sm:$0x30] %v1149
  %1154 = vst [vmem:[#allocation2 + $0x8] sm:$0x30] %v1150
  %v1155 = vmul.f32 %v954, %v1129
  %v1156 = vmul.f32 %v955, %v1130
  %v1159 = vrot.slane %v1155, 2
  %v1160 = vrot.slane %v1156, 2
  %1163 = vst [vmem:[#allocation2] sm:$0xc0] %v1159
  %1164 = vst [vmem:[#allocation2 + $0x8] sm:$0xc0] %v1160
  %v1165 = vld [vmem:[#allocation2] sm:$0xff]
  %v1166 = vld [vmem:[#allocation2 + $0x8] sm:$0xff]
  %1167 = vmatpush.msra.mxu0 0.0
  %1168 = vmatpush.msra.mxu0 0.0
  %1169 = vmatpush.msra.mxu0 0.0
  %1170 = vmatpush.msra.mxu0 0.0
  %1171 = vmatpush.msra.mxu0 0.0
  %1172 = vmatpush.msra.mxu0 0.0
  %1173 = vmatpush.msra.mxu0 0.0
  %1174 = vmatpush.msra.mxu0 0.0
  %1175 = vmatpush.msra.mxu0 0.0
  %1176 = vmatpush.msra.mxu0 0.0
  %1177 = vmatpush.msra.mxu0 0.0
  %1178 = vmatpush.msra.mxu0 0.0
  %1179 = vmatpush.msra.mxu0 0.0
  %1180 = vmatpush.msra.mxu0 0.0
  %1181 = vmatpush.msra.mxu0 0.0
  %1182 = vmatpush.msra.mxu0 %v1165
  %1183 = vmatmul.f32.gmra.mxu0 %v1004
  %v1184 = vpop.f32.mrf.mxu0
  %v1185 = vadd.f32 %v856, %v1184
  %1186 = vmatmul.f32.gmra.mxu0 %v1007
  %v1187 = vpop.f32.mrf.mxu0
  %v1188 = vadd.f32 %v858, %v1187
  %1189 = vdwg.mxu0
  %1190 = vmatpush.msra.mxu0 0.0
  %1191 = vmatpush.msra.mxu0 0.0
  %1192 = vmatpush.msra.mxu0 0.0
  %1193 = vmatpush.msra.mxu0 0.0
  %1194 = vmatpush.msra.mxu0 0.0
  %1195 = vmatpush.msra.mxu0 0.0
  %1196 = vmatpush.msra.mxu0 0.0
  %1197 = vmatpush.msra.mxu0 0.0
  %1198 = vmatpush.msra.mxu0 0.0
  %1199 = vmatpush.msra.mxu0 0.0
  %1200 = vmatpush.msra.mxu0 0.0
  %1201 = vmatpush.msra.mxu0 0.0
  %1202 = vmatpush.msra.mxu0 0.0
  %1203 = vmatpush.msra.mxu0 0.0
  %1204 = vmatpush.msra.mxu0 0.0
  %1205 = vmatpush.msra.mxu0 %v1166
  %1206 = vmatmul.f32.gmra.mxu0 %v1004
  %v1207 = vpop.f32.mrf.mxu0
  %v1208 = vadd.f32 %v875, %v1207
  %1209 = vmatmul.f32.gmra.mxu0 %v1007
  %v1210 = vpop.f32.mrf.mxu0
  %v1211 = vadd.f32 %v877, %v1210
  %1212 = vdwg.mxu0
  %1213 = vst [vmem:[%s12 + $0x20] sm:$0xff] %v1185
  %1214 = vst [vmem:[%s12 + $0x28] sm:$0xff] %v1208
  %1215 = vst [vmem:[%s12 + $0x30] sm:$0xff] %v1188
  %1216 = vst [vmem:[%s12 + $0x38] sm:$0xff] %v1211
  // Predicated region
  $region50: #{_lambda_.1} parent=0 // pred_check
    _
  $region51: #{_lambda_.1} parent=0 // pred_check_branch
    %1218 = sbr.rel (0) target = $region53
  $region52: #{_lambda_.1} parent=0 // pred_region
    _
  $region53: #{_lambda_.1} parent=0 // pred_fallthru
    _
  // Predicated region
  $region54: #{_lambda_.1} parent=0 // pred_check
    _
  $region55: #{_lambda_.1} parent=0 // pred_check_branch
    %1220 = sbr.rel (0) target = $region57
  $region56: #{_lambda_.1} parent=0 // pred_region
    _
  $region57: #{_lambda_.1} parent=0 // pred_fallthru
    _

</llo_original>
